<compile_context>
chip_gen: v6e
topology: v6e:2x2x1
jax: 0.10.0
libtpu: 0.0.40
codegen_flags: <defaults>
</compile_context>

<pallas_src>
import jax
import jax.numpy as jnp
from jax import lax
from jax.experimental import pallas as pl
from jax.experimental.pallas import tpu as pltpu


def _ceil_to(x, m):
    return ((x + m - 1) // m) * m


def _resize_conv_kernel(x_ref, s_ref, b_ref, bias_ref, o_ref, p_ref):
    # x_ref   : (1, Hp_al, K128)   zero-padded pre-upsample image rows, (W, Cin) on lanes
    # s_ref   : (Hs, KH*Hp_al)     exact 0/1 row selection (H-upsample + kh shift), kh-major
    # b_ref   : (K128, KH*tN)      banded weights (W-upsample + kw + Cin->Cout), kh-major
    # bias_ref: (1, tN)            bias tiled over this output-column tile (f32)
    # o_ref   : (1, Hs, tN)        lane-dense output tile
    # p_ref   : (KH*Hp_al, tN)     VMEM scratch staging the three kh slabs
    Hp_al = x_ref.shape[1]
    tN = p_ref.shape[1]
    KH = b_ref.shape[1] // tN

    rows = x_ref[0]                                                    # (Hp_al, K128)
    # Stage 1: ONE MXU pass for all three kernel rows at once (K = 128-padded Wp*Cin).
    p = jnp.dot(rows, b_ref[...], preferred_element_type=jnp.float32)  # (Hp_al, KH*tN)
    # Stage the kh slabs along sublanes: lane slices at multiples of 128, sublane offsets
    # at multiples of the packed-tile height, so stage 2 becomes a single matmul.
    for kh in range(KH):                                               # static 3-tap loop
        p_ref[kh * Hp_al:(kh + 1) * Hp_al, :] = (
            p[:, kh * tN:(kh + 1) * tN].astype(p_ref.dtype))
    # Stage 2: ONE MXU pass doing the exact 0/1 H-upsample + kh row selection.
    acc = jnp.dot(s_ref[...], p_ref[...], preferred_element_type=jnp.float32)
    o_ref[0] = (acc + bias_ref[...]).astype(o_ref.dtype)


def resize_conv2d(x_nchw, weight, bias, *, scale_factor, col_tile=None,
                  mxu_dtype=jnp.bfloat16, out_dtype=jnp.float32):
    """Forward pass of ResizeConv2d (nearest upsample + Conv2d(k=3, s=1, p=1)).

    x_nchw : (N, Cin, H, W) float32
    weight : (Cout, Cin, 3, 3) float32  (PyTorch Conv2d layout)
    bias   : (Cout,) float32
    Returns (N, Cout, H*s, W*s) in out_dtype (use bf16 if downstream tolerates it:
    the upsampled output dominates HBM traffic in this memory-bound regime).
    """
    s = int(scale_factor)
    N, Cin, H, W = x_nchw.shape
    Cout, Cin_w, KH, KW = weight.shape
    pad = 1  # nn.Conv2d(..., padding=1)
    assert Cin_w == Cin and KH == 3 and KW == 3, "module uses a 3x3, padding=1 conv"
    assert s >= 1

    Hs, Ws = H * s, W * s
    Hp, Wp = H + 2 * pad, W + 2 * pad
    K = Wp * Cin
    K128 = _ceil_to(K, 128)                     # contraction dim padded to full MXU K
    # Align the padded-row axis to the sublane packing of the MXU dtype (8 for f32,
    # 16 for bf16) so the kh-slab staging writes at packed-tile boundaries.
    row_align = 8 * max(1, 4 // jnp.dtype(mxu_dtype).itemsize)
    Hp_al = _ceil_to(Hp, row_align)
    Ncols = Ws * Cout
    Np = _ceil_to(Ncols, 128)                   # lane-dense, 128-aligned output columns
    if col_tile is None:
        tN = Np                                 # whole width in one tile (toy/decoder sizes)
    else:
        tN = _ceil_to(min(int(col_tile), Np), 128)
        Np = _ceil_to(Np, tN)
    n_col = Np // tN

    # --- input prep (pre-upsample sized, no overlapping restack): NCHW -> NHWC, zero-pad
    #     spatially by 1, flatten (W, Cin) onto lanes, zero-pad to (Hp_al, K128).
    x_nhwc = jnp.transpose(x_nchw, (0, 2, 3, 1))
    x_p = jnp.pad(x_nhwc, ((0, 0), (pad, pad), (pad, pad), (0, 0)))
    x_rows = jnp.pad(x_p.reshape(N, Hp, K),
                     ((0, 0), (0, Hp_al - Hp), (0, K128 - K))).astype(mxu_dtype)

    # --- banded weights B_cat: fold W-upsample + kw shift + Cin->Cout mixing, all kh,
    #     laid out kh-major within each output-column tile.
    wo = jnp.arange(Ws)
    v = wo[:, None] + jnp.arange(KW)[None, :] - pad            # tap col in upsampled image
    # negative/overflow v are masked by the surrounding where (keep that invariant)
    pc = jnp.where(v < 0, 0, jnp.where(v >= Ws, W + 1, pad + v // s))
    onehot_w = (pc[:, :, None] == jnp.arange(Wp)[None, None, :]).astype(jnp.float32)
    B = jnp.einsum("oihk,xkp->hpixo", weight, onehot_w,
                   precision=lax.Precision.HIGHEST)            # (KH, Wp, Cin, Ws, Cout)
    B = B.reshape(KH, K, Ncols)
    B = jnp.pad(B, ((0, 0), (0, K128 - K), (0, Np - Ncols)))
    B = B.reshape(KH, K128, n_col, tN).transpose(1, 2, 0, 3)
    B = B.reshape(K128, n_col * KH * tN).astype(mxu_dtype)

    # --- exact 0/1 selection S_cat: H-upsample + kh row shift, kh-major on the K axis ---
    t = jnp.arange(Hs)
    s_blocks = []
    for kh in range(KH):
        u = t + kh - pad                                       # tap row in upsampled image
        q = jnp.where(u < 0, 0, jnp.where(u >= Hs, H + 1, pad + u // s))
        s_blocks.append((q[:, None] == jnp.arange(Hp_al)[None, :]).astype(jnp.float32))
    S = jnp.concatenate(s_blocks, axis=1).astype(mxu_dtype)    # (Hs, KH*Hp_al), exact in bf16

    bias_flat = jnp.pad(jnp.tile(bias, Ws), (0, Np - Ncols)).reshape(1, Np)
    bias_flat = bias_flat.astype(jnp.float32)

    def build_call(single_buffer_invariants):
        def inv(shape, idx, invariant=True):
            # Grid-invariant operands need only a single VMEM buffer.
            if single_buffer_invariants and invariant:
                return pl.BlockSpec(shape, idx, pipeline_mode=pl.Buffered(buffer_count=1))
            return pl.BlockSpec(shape, idx)
        return pl.pallas_call(
            _resize_conv_kernel,
            out_shape=jax.ShapeDtypeStruct((N, Hs, Np), out_dtype),
            grid=(N, n_col),
            in_specs=[
                pl.BlockSpec((1, Hp_al, K128), lambda n, c: (n, 0, 0)),   # streams over N
                inv((Hs, KH * Hp_al), lambda n, c: (0, 0)),               # grid-invariant
                inv((K128, KH * tN), lambda n, c: (0, c), invariant=(n_col == 1)),
                inv((1, tN), lambda n, c: (0, c), invariant=(n_col == 1)),
            ],
            out_specs=pl.BlockSpec((1, Hs, tN), lambda n, c: (n, 0, c)),
            scratch_shapes=[pltpu.VMEM((KH * Hp_al, tN), mxu_dtype)],
            compiler_params=pltpu.CompilerParams(
                dimension_semantics=("parallel", "parallel")),
            # Toy/decoder blocks are well under every generation's scoped VMEM; for the
            # large-channel regime use col_tile and raise vmem_limit_bytes (64 MiB cap v7x).
        )

    try:
        out_flat = build_call(True)(x_rows, S, B, bias_flat)
    except Exception:
        # pl.Buffered(1) single-buffering unavailable on this JAX/Mosaic build; fall back
        # to default double-buffering (identical results, slightly more VMEM).
        out_flat = build_call(False)(x_rows, S, B, bias_flat)

    # layout plumbing only: lane-dense (N, Hs, Np) -> NCHW
    out = out_flat[:, :, :Ncols].reshape(N, Hs, Ws, Cout)
    return jnp.transpose(out, (0, 3, 1, 2))


def _reference(x_nchw, weight, bias, scale_factor):
    """Pure-JAX reference (nearest upsample + lax conv)."""
    s = scale_factor
    x_up = jnp.repeat(jnp.repeat(x_nchw, s, axis=2), s, axis=3)
    out = lax.conv_general_dilated(
        x_up, weight, window_strides=(1, 1), padding=((1, 1), (1, 1)),
        dimension_numbers=("NCHW", "OIHW", "NCHW"),
        precision=lax.Precision.HIGHEST)
    return out + bias.reshape(1, -1, 1, 1)


if __name__ == "__main__":
    # ResizeConv2d(in_channels=4, out_channels=8, kernel_size=3, scale_factor=2)
    N, Cin, H, W = 2, 4, 16, 16
    Cout, KH, KW = 8, 3, 3
    scale = 2

    key = jax.random.PRNGKey(0)
    kx, kw_, kb = jax.random.split(key, 3)
    x = jax.random.normal(kx, (N, Cin, H, W), dtype=jnp.float32)
    # Deterministic synthetic parameters (kaiming-uniform-ish scale, not a checkpoint).
    fan_in = Cin * KH * KW
    bound = 1.0 / (fan_in ** 0.5)
    weight = jax.random.uniform(kw_, (Cout, Cin, KH, KW), jnp.float32,
                                minval=-bound, maxval=bound)
    bias = jax.random.uniform(kb, (Cout,), jnp.float32, minval=-bound, maxval=bound)

    ref = _reference(x, weight, bias, scale)

    # Exactness check: f32 MXU operands, tight tolerance.
    out_f32 = jax.block_until_ready(
        resize_conv2d(x, weight, bias, scale_factor=scale, mxu_dtype=jnp.float32))
    assert out_f32.shape == (N, Cout, H * scale, W * scale), out_f32.shape
    assert jnp.allclose(out_f32, ref, atol=1e-4, rtol=1e-4), \
        f"f32 mismatch, max abs err = {jnp.max(jnp.abs(out_f32 - ref))}"

    # Default fast path: bf16 MXU operands on all generations, f32 accumulation.
    out = jax.block_until_ready(resize_conv2d(x, weight, bias, scale_factor=scale))
    assert out.shape == (N, Cout, H * scale, W * scale), out.shape
    assert jnp.allclose(out, ref, atol=5e-2, rtol=5e-2), \
        f"bf16 mismatch, max abs err = {jnp.max(jnp.abs(out - ref))}"

    print("KERNEL_OK")
</pallas_src>

<mosaic_0001>
module attributes {stable_mosaic.version = 11 : i64} {
  func.func @_resize_conv_kernel(%arg0: i32, %arg1: i32, %arg2: memref<1x24x128xf32, #tpu.memory_space<vmem>>, %arg3: memref<32x72xf32, #tpu.memory_space<vmem>>, %arg4: memref<128x768xf32, #tpu.memory_space<vmem>>, %arg5: memref<1x256xf32, #tpu.memory_space<vmem>>, %arg6: memref<1x32x256xf32, #tpu.memory_space<vmem>>, %arg7: memref<72x256xf32, #tpu.memory_space<vmem>>) attributes {dimension_semantics = [#tpu.dimension_semantics<parallel>, #tpu.dimension_semantics<parallel>], iteration_bounds = array<i64: 2, 1>, scalar_prefetch = 0 : i64, scratch_operands = 1 : i64, tpu.core_type = #tpu.core_type<tc>, window_params = [{transform_indices = @transform_0, window_bounds = array<i64: 1, 24, 128>}, {pipeline_mode = #tpu.pipeline_mode<synchronous>, transform_indices = @transform_1, window_bounds = array<i64: 32, 72>}, {pipeline_mode = #tpu.pipeline_mode<synchronous>, transform_indices = @transform_2, window_bounds = array<i64: 128, 768>}, {pipeline_mode = #tpu.pipeline_mode<synchronous>, transform_indices = @transform_3, window_bounds = array<i64: 1, 256>}, {transform_indices = @transform_4, window_bounds = array<i64: 1, 32, 256>}]} {
    %c0 = arith.constant 0 : index
    %c0_0 = arith.constant 0 : index
    %c0_1 = arith.constant 0 : index
    %0 = vector.load %arg2[%c0, %c0_0, %c0_1] : memref<1x24x128xf32, #tpu.memory_space<vmem>>, vector<1x24x128xf32>
    %1 = vector.shape_cast %0 : vector<1x24x128xf32> to vector<24x128xf32>
    %c0_2 = arith.constant 0 : index
    %c0_3 = arith.constant 0 : index
    %2 = vector.load %arg4[%c0_2, %c0_3] : memref<128x768xf32, #tpu.memory_space<vmem>>, vector<128x768xf32>
    %cst = arith.constant dense<0.000000e+00> : vector<24x768xf32>
    %3 = tpu.matmul %1, %2, %cst {dimension_numbers = #tpu.dot_dimension_numbers<[1], [0], [0], [1], [0, 0, 1, 1], [], []>} : vector<24x128xf32>, vector<128x768xf32>, vector<24x768xf32> -> vector<24x768xf32>
    %4 = vector.extract_strided_slice %3 {offsets = [0, 0], sizes = [24, 256], strides = [1, 1]} : vector<24x768xf32> to vector<24x256xf32>
    %c0_4 = arith.constant 0 : index
    %c0_5 = arith.constant 0 : index
    %5 = vector.load %arg7[%c0_4, %c0_5] : memref<72x256xf32, #tpu.memory_space<vmem>>, vector<24x256xf32>
    tpu.vector_store %arg7[%c0_4, %c0_5], %4 {strides = array<i32>} : memref<72x256xf32, #tpu.memory_space<vmem>>, vector<24x256xf32>,
    %6 = vector.extract_strided_slice %3 {offsets = [0, 256], sizes = [24, 256], strides = [1, 1]} : vector<24x768xf32> to vector<24x256xf32>
    %c24 = arith.constant 24 : index
    %c0_6 = arith.constant 0 : index
    %7 = vector.load %arg7[%c24, %c0_6] : memref<72x256xf32, #tpu.memory_space<vmem>>, vector<24x256xf32>
    tpu.vector_store %arg7[%c24, %c0_6], %6 {strides = array<i32>} : memref<72x256xf32, #tpu.memory_space<vmem>>, vector<24x256xf32>,
    %8 = vector.extract_strided_slice %3 {offsets = [0, 512], sizes = [24, 256], strides = [1, 1]} : vector<24x768xf32> to vector<24x256xf32>
    %c48 = arith.constant 48 : index
    %c0_7 = arith.constant 0 : index
    %9 = vector.load %arg7[%c48, %c0_7] : memref<72x256xf32, #tpu.memory_space<vmem>>, vector<24x256xf32>
    tpu.vector_store %arg7[%c48, %c0_7], %8 {strides = array<i32>} : memref<72x256xf32, #tpu.memory_space<vmem>>, vector<24x256xf32>,
    %c0_8 = arith.constant 0 : index
    %c0_9 = arith.constant 0 : index
    %10 = vector.load %arg3[%c0_8, %c0_9] : memref<32x72xf32, #tpu.memory_space<vmem>>, vector<32x72xf32>
    %c0_10 = arith.constant 0 : index
    %c0_11 = arith.constant 0 : index
    %11 = vector.load %arg7[%c0_10, %c0_11] : memref<72x256xf32, #tpu.memory_space<vmem>>, vector<72x256xf32>
    %cst_12 = arith.constant dense<0.000000e+00> : vector<32x256xf32>
    %12 = tpu.matmul %10, %11, %cst_12 {dimension_numbers = #tpu.dot_dimension_numbers<[1], [0], [0], [1], [0, 0, 1, 1], [], []>} : vector<32x72xf32>, vector<72x256xf32>, vector<32x256xf32> -> vector<32x256xf32>
    %c0_13 = arith.constant 0 : index
    %c0_14 = arith.constant 0 : index
    %13 = vector.load %arg5[%c0_13, %c0_14] : memref<1x256xf32, #tpu.memory_space<vmem>>, vector<1x256xf32>
    %14 = vector.broadcast %13 : vector<1x256xf32> to vector<32x256xf32>
    %15 = arith.addf %12, %14 : vector<32x256xf32>
    %c0_15 = arith.constant 0 : index
    %c0_16 = arith.constant 0 : index
    %c0_17 = arith.constant 0 : index
    %16 = vector.load %arg6[%c0_15, %c0_16, %c0_17] : memref<1x32x256xf32, #tpu.memory_space<vmem>>, vector<1x32x256xf32>
    %17 = vector.shape_cast %16 : vector<1x32x256xf32> to vector<32x256xf32>
    %18 = vector.shape_cast %15 : vector<32x256xf32> to vector<1x32x256xf32>
    tpu.vector_store %arg6[%c0_15, %c0_16, %c0_17], %18 {strides = array<i32>} : memref<1x32x256xf32, #tpu.memory_space<vmem>>, vector<1x32x256xf32>,
    return
  }
  func.func @transform_0(%arg0: i32, %arg1: i32) -> (i32, i32, i32) {
    %c0_i32 = arith.constant 0 : i32
    %c0_i32_0 = arith.constant 0 : i32
    %c0_i32_1 = arith.constant 0 : i32
    return %arg0, %c0_i32, %c0_i32_0 : i32, i32, i32
  }
  func.func @transform_1(%arg0: i32, %arg1: i32) -> (i32, i32) {
    %c0_i32 = arith.constant 0 : i32
    %c0_i32_0 = arith.constant 0 : i32
    %c0_i32_1 = arith.constant 0 : i32
    return %c0_i32, %c0_i32_0 : i32, i32
  }
  func.func @transform_2(%arg0: i32, %arg1: i32) -> (i32, i32) {
    %c0_i32 = arith.constant 0 : i32
    %c0_i32_0 = arith.constant 0 : i32
    return %c0_i32, %arg1 : i32, i32
  }
  func.func @transform_3(%arg0: i32, %arg1: i32) -> (i32, i32) {
    %c0_i32 = arith.constant 0 : i32
    %c0_i32_0 = arith.constant 0 : i32
    return %c0_i32, %arg1 : i32, i32
  }
  func.func @transform_4(%arg0: i32, %arg1: i32) -> (i32, i32, i32) {
    %c0_i32 = arith.constant 0 : i32
    %c0_i32_0 = arith.constant 0 : i32
    return %arg0, %c0_i32, %arg1 : i32, i32, i32
  }
}

module attributes {stable_mosaic.version = 11 : i64} {
  func.func @_resize_conv_kernel(%arg0: i32, %arg1: i32, %arg2: memref<1x24x128xf32, #tpu.memory_space<vmem>>, %arg3: memref<32x72xf32, #tpu.memory_space<vmem>>, %arg4: memref<128x768xf32, #tpu.memory_space<vmem>>, %arg5: memref<1x256xf32, #tpu.memory_space<vmem>>, %arg6: memref<1x32x256xf32, #tpu.memory_space<vmem>>, %arg7: memref<72x256xf32, #tpu.memory_space<vmem>>) attributes {dimension_semantics = [#tpu.dimension_semantics<parallel>, #tpu.dimension_semantics<parallel>], iteration_bounds = array<i64: 2, 1>, scalar_prefetch = 0 : i64, scratch_operands = 1 : i64, tpu.core_type = #tpu.core_type<tc>, window_params = [{transform_indices = @transform_0, window_bounds = array<i64: 1, 24, 128>}, {pipeline_mode = #tpu.pipeline_mode<synchronous>, transform_indices = @transform_1, window_bounds = array<i64: 32, 72>}, {transform_indices = @transform_2, window_bounds = array<i64: 128, 768>}, {transform_indices = @transform_3, window_bounds = array<i64: 1, 256>}, {transform_indices = @transform_4, window_bounds = array<i64: 1, 32, 256>}]} {
    %c0 = arith.constant 0 : index
    %c0_0 = arith.constant 0 : index
    %c0_1 = arith.constant 0 : index
    %0 = vector.load %arg2[%c0, %c0_0, %c0_1] : memref<1x24x128xf32, #tpu.memory_space<vmem>>, vector<1x24x128xf32>
    %1 = vector.shape_cast %0 : vector<1x24x128xf32> to vector<24x128xf32>
    %c0_2 = arith.constant 0 : index
    %c0_3 = arith.constant 0 : index
    %2 = vector.load %arg4[%c0_2, %c0_3] : memref<128x768xf32, #tpu.memory_space<vmem>>, vector<128x768xf32>
    %cst = arith.constant dense<0.000000e+00> : vector<24x768xf32>
    %3 = tpu.matmul %1, %2, %cst {dimension_numbers = #tpu.dot_dimension_numbers<[1], [0], [0], [1], [0, 0, 1, 1], [], []>} : vector<24x128xf32>, vector<128x768xf32>, vector<24x768xf32> -> vector<24x768xf32>
    %4 = vector.extract_strided_slice %3 {offsets = [0, 0], sizes = [24, 256], strides = [1, 1]} : vector<24x768xf32> to vector<24x256xf32>
    %c0_4 = arith.constant 0 : index
    %c0_5 = arith.constant 0 : index
    %5 = vector.load %arg7[%c0_4, %c0_5] : memref<72x256xf32, #tpu.memory_space<vmem>>, vector<24x256xf32>
    tpu.vector_store %arg7[%c0_4, %c0_5], %4 {strides = array<i32>} : memref<72x256xf32, #tpu.memory_space<vmem>>, vector<24x256xf32>,
    %6 = vector.extract_strided_slice %3 {offsets = [0, 256], sizes = [24, 256], strides = [1, 1]} : vector<24x768xf32> to vector<24x256xf32>
    %c24 = arith.constant 24 : index
    %c0_6 = arith.constant 0 : index
    %7 = vector.load %arg7[%c24, %c0_6] : memref<72x256xf32, #tpu.memory_space<vmem>>, vector<24x256xf32>
    tpu.vector_store %arg7[%c24, %c0_6], %6 {strides = array<i32>} : memref<72x256xf32, #tpu.memory_space<vmem>>, vector<24x256xf32>,
    %8 = vector.extract_strided_slice %3 {offsets = [0, 512], sizes = [24, 256], strides = [1, 1]} : vector<24x768xf32> to vector<24x256xf32>
    %c48 = arith.constant 48 : index
    %c0_7 = arith.constant 0 : index
    %9 = vector.load %arg7[%c48, %c0_7] : memref<72x256xf32, #tpu.memory_space<vmem>>, vector<24x256xf32>
    tpu.vector_store %arg7[%c48, %c0_7], %8 {strides = array<i32>} : memref<72x256xf32, #tpu.memory_space<vmem>>, vector<24x256xf32>,
    %c0_8 = arith.constant 0 : index
    %c0_9 = arith.constant 0 : index
    %10 = vector.load %arg3[%c0_8, %c0_9] : memref<32x72xf32, #tpu.memory_space<vmem>>, vector<32x72xf32>
    %c0_10 = arith.constant 0 : index
    %c0_11 = arith.constant 0 : index
    %11 = vector.load %arg7[%c0_10, %c0_11] : memref<72x256xf32, #tpu.memory_space<vmem>>, vector<72x256xf32>
    %cst_12 = arith.constant dense<0.000000e+00> : vector<32x256xf32>
    %12 = tpu.matmul %10, %11, %cst_12 {dimension_numbers = #tpu.dot_dimension_numbers<[1], [0], [0], [1], [0, 0, 1, 1], [], []>} : vector<32x72xf32>, vector<72x256xf32>, vector<32x256xf32> -> vector<32x256xf32>
    %c0_13 = arith.constant 0 : index
    %c0_14 = arith.constant 0 : index
    %13 = vector.load %arg5[%c0_13, %c0_14] : memref<1x256xf32, #tpu.memory_space<vmem>>, vector<1x256xf32>
    %14 = vector.broadcast %13 : vector<1x256xf32> to vector<32x256xf32>
    %15 = arith.addf %12, %14 : vector<32x256xf32>
    %c0_15 = arith.constant 0 : index
    %c0_16 = arith.constant 0 : index
    %c0_17 = arith.constant 0 : index
    %16 = vector.load %arg6[%c0_15, %c0_16, %c0_17] : memref<1x32x256xf32, #tpu.memory_space<vmem>>, vector<1x32x256xf32>
    %17 = vector.shape_cast %16 : vector<1x32x256xf32> to vector<32x256xf32>
    %18 = vector.shape_cast %15 : vector<32x256xf32> to vector<1x32x256xf32>
    tpu.vector_store %arg6[%c0_15, %c0_16, %c0_17], %18 {strides = array<i32>} : memref<1x32x256xf32, #tpu.memory_space<vmem>>, vector<1x32x256xf32>,
    return
  }
  func.func @transform_0(%arg0: i32, %arg1: i32) -> (i32, i32, i32) {
    %c0_i32 = arith.constant 0 : i32
    %c0_i32_0 = arith.constant 0 : i32
    %c0_i32_1 = arith.constant 0 : i32
    return %arg0, %c0_i32, %c0_i32_0 : i32, i32, i32
  }
  func.func @transform_1(%arg0: i32, %arg1: i32) -> (i32, i32) {
    %c0_i32 = arith.constant 0 : i32
    %c0_i32_0 = arith.constant 0 : i32
    %c0_i32_1 = arith.constant 0 : i32
    return %c0_i32, %c0_i32_0 : i32, i32
  }
  func.func @transform_2(%arg0: i32, %arg1: i32) -> (i32, i32) {
    %c0_i32 = arith.constant 0 : i32
    %c0_i32_0 = arith.constant 0 : i32
    return %c0_i32, %arg1 : i32, i32
  }
  func.func @transform_3(%arg0: i32, %arg1: i32) -> (i32, i32) {
    %c0_i32 = arith.constant 0 : i32
    %c0_i32_0 = arith.constant 0 : i32
    return %c0_i32, %arg1 : i32, i32
  }
  func.func @transform_4(%arg0: i32, %arg1: i32) -> (i32, i32, i32) {
    %c0_i32 = arith.constant 0 : i32
    %c0_i32_0 = arith.constant 0 : i32
    return %arg0, %c0_i32, %arg1 : i32, i32, i32
  }
}

</mosaic_0001>

<llo_original>
// kernel: tpu_custom_call.1
$region0: #{tpu_custom_call.1}
  #allocation0 [shape = 'u32[]', space=smem, size = 0x4, offset = 0x4, fixed_abs, tag = 'smem constant byte address 0x4 - core index']
  #allocation1 [shape = 'u32[144,128]{1,0:T(1,128)}', space=vmem, size = 0x12000, scoped, tag = 'internal scratch']
  #allocation2 [shape = 'f32[72,256]{1,0:T(8,128)}', space=vmem, size = 0x12000, scoped, tag = 'scratch operand']
  %s0 = inlined_call_operand.hbm [shape: f32[2,24,128], index: 0, kind: input, shape index: {}]
  %s1 = inlined_call_operand.hbm [shape: f32[32,72], index: 1, kind: input, shape index: {}]
  %s2 = inlined_call_operand.hbm [shape: f32[128,768], index: 2, kind: input, shape index: {}]
  %s3 = inlined_call_operand.vmem [shape: f32[1,256], index: 3, kind: input, shape index: {}]
  %s4 = inlined_call_operand.hbm [shape: f32[2,32,256], index: 4, kind: output, shape index: {}]
  %s5 = sld [smem:[#allocation0]]
  $region61: #{tpu_custom_call.1} parent=0
    _
  %s7 = ssub.s32 1, %s5
  %s8 = scalar_select 0, %s7, %s5
  $region1: #{tpu_custom_call.1} parent=0
    #allocation3 [shape = 'u8[24576]{0}', space=vmem, size = 0x6000, scoped, tag = 'input window, operand 0']
    #allocation4 [shape = 's32[2]{0}', space=sflag, size = 0x8, scoped, tag = 'scoped memory for tpu_custom_call.1']
    #allocation5 [shape = 's32[2]{0}', space=sflag, size = 0x8, scoped, tag = 'scoped memory for tpu_custom_call.1']
    #allocation6 [shape = 'u8[16384]{0}', space=vmem, size = 0x4000, scoped, tag = 'input window, operand 1, single buffered']
    #allocation7 [shape = 's32[1]{0}', space=sflag, size = 0x4, scoped, tag = 'scoped memory for tpu_custom_call.1']
    #allocation8 [shape = 'u8[393216]{0}', space=vmem, size = 0x60000, scoped, tag = 'input window, operand 2, single buffered']
    #allocation9 [shape = 'u8[65536]{0}', space=vmem, size = 0x10000, scoped, tag = 'output window, operand 0']
    %9 = vsyncpa [#allocation4], 0
    %s10 = scalar_lea.sflag [#allocation4], 1
    %11 = vsyncpa %s10, 0
    %12 = vsyncpa [#allocation7], 0
    %13 = vsyncpa [#allocation5], 0
    %s14 = scalar_lea.sflag [#allocation5], 1
    %15 = vsyncpa %s14, 0
    loop: start=0, step=1, limit=4
    $region2: #{tpu_custom_call.1} parent=1 // loop_pre_header
      _
    $region3: #{tpu_custom_call.1} parent=1 // loop_header
      %s17 = sphi 0, %s21
      %p18 = scmp.ge.s32.totalorder %s17, 4
      %s24 = sphi 0, %s36
      %s25 = sphi 0, %s32
      %s26 = sphi 0, %s24
      %s27 = sphi 0, %s25
      %s28 = sphi 0, %s26
      %s29 = sphi 0, %s27
      %s39 = sphi 0, %s41
      %s42 = sphi 0, %s39
      %s43 = sphi 0, %s42
      %s59 = sphi 0, %s43
      %s63 = sphi 0, %s63
      %s65 = sphi 0, %s63
      %s66 = sphi 0, %s65
      %s80 = sphi 0, %s66
      %s86 = sphi 0, %s88
      %s89 = sphi 0, %s86
      %s90 = sphi 0, %s89
      %s106 = sphi 0, %s90
      %s112 = sphi 0, %s114
      %s115 = sphi 0, %s112
      %s116 = sphi 0, %s115
      %s132 = sphi 0, %s116
      %s140 = sphi 0, %s142
      %s143 = sphi 0, %s140
      %s144 = sphi 0, %s143
      %s160 = sphi 0, %s144
    $region4: #{tpu_custom_call.1} parent=1 // loop_header_branch
      %20 = sbr.rel (%p18) target = $region8
    $region5: #{tpu_custom_call.1} parent=1 // loop_body
      %s22 = ssub.s32 %s17, 1
      %s23 = ssub.s32 %s17, 2
      %s30 = sadd.s32 1, %s25
      %p31 = scmp.ge.s32.totalorder %s30, 1
      %s32 = scalar_select %p31, 0, %s30
      %s33 = sadd.s32 1, %s24
      %s34 = scalar_select %p31, %s33, %s24
      %p35 = scmp.ge.s32.totalorder %s34, 2
      %s36 = scalar_select %p35, 0, %s34
      %s37 = ssub.s32 %s24, %s36
      %p38 = scmp.eq.s32.totalorder %s37, 0
      %s40 = sadd.s32 %s39, 1
      %s41 = scalar_select %p38, %s39, %s40
      %p44 = pneg %p38
      %p45 = scmp.eq.s32.totalorder %s17, 1
      %p46 = por %p44, %p45
      %p47 = scmp.ne.s32.totalorder %s39, %s42
      %p48 = scmp.eq.s32.totalorder %s17, 0
      %p49 = por %p47, %p48
      %p50 = scmp.ne.s32.totalorder %s39, %s42
      %p51 = scmp.eq.s32.totalorder %s22, 1
      %p52 = por %p50, %p51
      %p53 = scmp.ne.s32.totalorder %s42, %s43
      %p54 = scmp.eq.s32.totalorder %s22, 0
      %p55 = por %p53, %p54
      %p56 = scmp.ne.s32.totalorder %s42, %s43
      %p57 = scmp.eq.s32.totalorder %s23, 1
      %p58 = por %p56, %p57
      %p60 = scmp.ne.s32.totalorder %s43, %s59
      %p61 = scmp.eq.s32.totalorder %s23, 0
      %p62 = por %p60, %p61
      %s64 = sadd.s32 %s63, 1
      %p67 = scmp.eq.s32.totalorder %s17, 1
      %p68 = scmp.ne.s32.totalorder %s63, %s65
      %p69 = scmp.eq.s32.totalorder %s17, 0
      %p70 = por %p68, %p69
      %p71 = scmp.ne.s32.totalorder %s63, %s65
      %p72 = scmp.eq.s32.totalorder %s22, 1
      %p73 = por %p71, %p72
      %p74 = scmp.ne.s32.totalorder %s65, %s66
      %p75 = scmp.eq.s32.totalorder %s22, 0
      %p76 = por %p74, %p75
      %p77 = scmp.ne.s32.totalorder %s65, %s66
      %p78 = scmp.eq.s32.totalorder %s23, 1
      %p79 = por %p77, %p78
      %p81 = scmp.ne.s32.totalorder %s66, %s80
      %p82 = scmp.eq.s32.totalorder %s23, 0
      %p83 = por %p81, %p82
      %s84 = ssub.s32 %s25, %s32
      %p85 = scmp.eq.s32.totalorder %s84, 0
      %s87 = sadd.s32 %s86, 1
      %s88 = scalar_select %p85, %s86, %s87
      %p91 = pneg %p85
      %p92 = scmp.eq.s32.totalorder %s17, 1
      %p93 = por %p91, %p92
      %p94 = scmp.ne.s32.totalorder %s86, %s89
      %p95 = scmp.eq.s32.totalorder %s17, 0
      %p96 = por %p94, %p95
      %p97 = scmp.ne.s32.totalorder %s86, %s89
      %p98 = scmp.eq.s32.totalorder %s22, 1
      %p99 = por %p97, %p98
      %p100 = scmp.ne.s32.totalorder %s89, %s90
      %p101 = scmp.eq.s32.totalorder %s22, 0
      %p102 = por %p100, %p101
      %p103 = scmp.ne.s32.totalorder %s89, %s90
      %p104 = scmp.eq.s32.totalorder %s23, 1
      %p105 = por %p103, %p104
      %p107 = scmp.ne.s32.totalorder %s90, %s106
      %p108 = scmp.eq.s32.totalorder %s23, 0
      %p109 = por %p107, %p108
      %s110 = ssub.s32 %s25, %s32
      %p111 = scmp.eq.s32.totalorder %s110, 0
      %s113 = sadd.s32 %s112, 1
      %s114 = scalar_select %p111, %s112, %s113
      %p117 = pneg %p111
      %p118 = scmp.eq.s32.totalorder %s17, 1
      %p119 = por %p117, %p118
      %p120 = scmp.ne.s32.totalorder %s112, %s115
      %p121 = scmp.eq.s32.totalorder %s17, 0
      %p122 = por %p120, %p121
      %p123 = scmp.ne.s32.totalorder %s112, %s115
      %p124 = scmp.eq.s32.totalorder %s22, 1
      %p125 = por %p123, %p124
      %p126 = scmp.ne.s32.totalorder %s115, %s116
      %p127 = scmp.eq.s32.totalorder %s22, 0
      %p128 = por %p126, %p127
      %p129 = scmp.ne.s32.totalorder %s115, %s116
      %p130 = scmp.eq.s32.totalorder %s23, 1
      %p131 = por %p129, %p130
      %p133 = scmp.ne.s32.totalorder %s116, %s132
      %p134 = scmp.eq.s32.totalorder %s23, 0
      %p135 = por %p133, %p134
      %s136 = ssub.s32 %s24, %s36
      %s137 = ssub.s32 %s25, %s32
      %s138 = sor.u32 %s136, %s137
      %p139 = scmp.eq.s32.totalorder %s138, 0
      %s141 = sadd.s32 %s140, 1
      %s142 = scalar_select %p139, %s140, %s141
      %p145 = pneg %p139
      %p146 = scmp.eq.s32.totalorder %s17, 1
      %p147 = por %p145, %p146
      %p148 = scmp.ne.s32.totalorder %s140, %s143
      %p149 = scmp.eq.s32.totalorder %s17, 0
      %p150 = por %p148, %p149
      %p151 = scmp.ne.s32.totalorder %s140, %s143
      %p152 = scmp.eq.s32.totalorder %s22, 1
      %p153 = por %p151, %p152
      %p154 = scmp.ne.s32.totalorder %s143, %s144
      %p155 = scmp.eq.s32.totalorder %s22, 0
      %p156 = por %p154, %p155
      %p157 = scmp.ne.s32.totalorder %s143, %s144
      %p158 = scmp.eq.s32.totalorder %s23, 1
      %p159 = por %p157, %p158
      %p161 = scmp.ne.s32.totalorder %s144, %s160
      %p162 = scmp.eq.s32.totalorder %s23, 0
      %p163 = por %p161, %p162
      %p164 = scmp.le.s32.totalorder 1, %s17
      %p165 = scmp.lt.s32.totalorder %s17, 3
      %p166 = pnand %p164, %p165
      %p167 = pneg %p166
      // Predicated region
      $region9: #{tpu_custom_call.1} parent=5 // pred_check
        _
      $region10: #{tpu_custom_call.1} parent=5 // pred_check_branch
        %169 = sbr.rel (%p166) target = $region12
      $region11: #{tpu_custom_call.1} parent=5 // pred_region
        %s170 = ssub.s32 %s17, 1
        // Predicated region
        $region13: #{tpu_custom_call.1} parent=11 // pred_check
          %p171 = pneg %p76
        $region14: #{tpu_custom_call.1} parent=11 // pred_check_branch
          %173 = sbr.rel (%p171) target = $region16
        $region15: #{tpu_custom_call.1} parent=11 // pred_region
          %s175 = ssub.s32 512, 512
          %176 = vsyncadd [#allocation7], %s175
          %s177 = sshll.u32 [#allocation6], 4
          %s178 = int_to_ptr.vmem [resolvable:$true] %s177
          %183 = dma.hbm_to_vmem [thread:$0]  %s1, 512, %s178, [#allocation7], 128, 128, 8
        $region16: #{tpu_custom_call.1} parent=11 // pred_fallthru
          _
        // Predicated region
        $region17: #{tpu_custom_call.1} parent=11 // pred_check
          %p184 = pneg %p102
        $region18: #{tpu_custom_call.1} parent=11 // pred_check_branch
          %186 = sbr.rel (%p184) target = $region20
        $region19: #{tpu_custom_call.1} parent=11 // pred_region
          %s187 = smul.u32 6, %s27
          %s189 = ssub.s32 12288, 12288
          %190 = vsyncadd [#allocation7], %s189
          %s191 = smul.addr %s187, 128
          %s192 = scalar_lea.hbm %s2, %s191
          %s193 = sshll.u32 [#allocation8], 4
          %s194 = int_to_ptr.vmem [resolvable:$true] %s193
          %199 = dma.hbm_to_vmem [thread:$0]  %s192, 12288, %s194, [#allocation7], 768, 768, 48
        $region20: #{tpu_custom_call.1} parent=11 // pred_fallthru
          _
        // Predicated region
        $region21: #{tpu_custom_call.1} parent=11 // pred_check
          %p200 = pneg %p128
        $region22: #{tpu_custom_call.1} parent=11 // pred_check_branch
          %202 = sbr.rel (%p200) target = $region24
        $region23: #{tpu_custom_call.1} parent=11 // pred_region
          %s203 = smul.u32 2, %s27
          %p204 = scmp.lt.s32.totalorder %s203, 1
          %s205 = scalar_select %p204, %s203, 1
          %s206 = scalar_lea.vmem %s3, %s205
          %s207 = smul.u32 2, %s27
        $region24: #{tpu_custom_call.1} parent=11 // pred_fallthru
          _
      $region12: #{tpu_custom_call.1} parent=5 // pred_fallthru
        _
      %p208 = scmp.lt.s32.totalorder %s17, 2
      // Predicated region
      $region25: #{tpu_custom_call.1} parent=5 // pred_check
        %p209 = pneg %p208
      $region26: #{tpu_custom_call.1} parent=5 // pred_check_branch
        %211 = sbr.rel (%p209) target = $region28
      $region27: #{tpu_custom_call.1} parent=5 // pred_region
        // Predicated region
        $region29: #{tpu_custom_call.1} parent=27 // pred_check
          %p212 = pneg %p49
        $region30: #{tpu_custom_call.1} parent=27 // pred_check_branch
          %214 = sbr.rel (%p212) target = $region32
        $region31: #{tpu_custom_call.1} parent=27 // pred_region
          %s215 = sand.u32 %s39, 1
          %s216 = scalar_lea.sflag [#allocation4], %s215
          %s217 = sand.u32 %s39, 1
          %s218 = smul.addr %s217, 24
          %s219 = scalar_lea.vmem [#allocation3], %s218
          %s221 = ssub.s32 384, 384
          %222 = vsyncadd %s216, %s221
          %s223 = smul.addr %s24, 3
          %s224 = smul.addr %s223, 128
          %s225 = scalar_lea.hbm %s0, %s224
          %s226 = sshll.u32 %s219, 4
          %s227 = int_to_ptr.vmem [resolvable:$true] %s226
          %232 = dma.hbm_to_vmem [thread:$0]  %s225, 384, %s227, %s216, 128, 128, 8
        $region32: #{tpu_custom_call.1} parent=27 // pred_fallthru
          _
      $region28: #{tpu_custom_call.1} parent=5 // pred_fallthru
        _
      %p233 = scmp.le.s32.totalorder 1, %s17
      %p234 = scmp.lt.s32.totalorder %s17, 3
      %p235 = pnand %p233, %p234
      %p236 = pneg %p235
      // Predicated region
      $region33: #{tpu_custom_call.1} parent=5 // pred_check
        _
      $region34: #{tpu_custom_call.1} parent=5 // pred_check_branch
        %238 = sbr.rel (%p235) target = $region36
      $region35: #{tpu_custom_call.1} parent=5 // pred_region
        %s239 = ssub.s32 %s17, 1
        %s240 = sand.u32 %s42, 1
        %s241 = scalar_lea.sflag [#allocation4], %s240
        %s242 = sand.u32 %s42, 1
        %s243 = smul.addr %s242, 24
        %s244 = scalar_lea.vmem [#allocation3], %s243
        // Predicated region
        $region37: #{tpu_custom_call.1} parent=35 // pred_check
          %p245 = pneg %p55
        $region38: #{tpu_custom_call.1} parent=35 // pred_check_branch
          %247 = sbr.rel (%p245) target = $region40
        $region39: #{tpu_custom_call.1} parent=35 // pred_region
          %248 = dma.done %s241, 384
        $region40: #{tpu_custom_call.1} parent=35 // pred_fallthru
          _
        // Predicated region
        $region41: #{tpu_custom_call.1} parent=35 // pred_check
          %p249 = pneg %p76
        $region42: #{tpu_custom_call.1} parent=35 // pred_check_branch
          %251 = sbr.rel (%p249) target = $region44
        $region43: #{tpu_custom_call.1} parent=35 // pred_region
          %252 = dma.done [#allocation7], 512
        $region44: #{tpu_custom_call.1} parent=35 // pred_fallthru
          _
        // Predicated region
        $region45: #{tpu_custom_call.1} parent=35 // pred_check
          %p253 = pneg %p102
        $region46: #{tpu_custom_call.1} parent=35 // pred_check_branch
          %255 = sbr.rel (%p253) target = $region48
        $region47: #{tpu_custom_call.1} parent=35 // pred_region
          %256 = dma.done [#allocation7], 12288
        $region48: #{tpu_custom_call.1} parent=35 // pred_fallthru
          _
        %s257 = sand.u32 %s42, 1
        %s258 = scalar_lea.sflag [#allocation4], %s257
        %s259 = sand.u32 %s42, 1
        %s260 = smul.addr %s259, 24
        %s261 = scalar_lea.vmem [#allocation3], %s260
        %p262 = pneg %p55
        %p263 = pneg %p52
        %p264 = pneg %p76
        %p265 = pneg %p73
        %p266 = pneg %p102
        %p267 = pneg %p99
        %s268 = smul.u32 2, %s27
        %p269 = scmp.lt.s32.totalorder %s268, 1
        %s270 = scalar_select %p269, %s268, 1
        %s271 = scalar_lea.vmem %s3, %s270
        %p272 = pneg %p128
        %p273 = pneg %p125
        %p274 = pneg %p156
        %p275 = pneg %p153
        %s276 = sand.u32 %s143, 1
        %s277 = scalar_lea.sflag [#allocation5], %s276
        %s278 = sand.u32 %s143, 1
        %s279 = smul.addr %s278, 64
        %s280 = scalar_lea.vmem [#allocation9], %s279
        %s281 = smul.u32 6, %s27
        %s282 = smul.u32 2, %s27
        %p283 = scmp.lt.s32.totalorder %s282, 1
        %s284 = scalar_select %p283, %s282, 1
        %s285 = scalar_lea.vmem %s3, %s284
        %s286 = smul.u32 2, %s27
        %s287 = smul.u32 2, %s27
        %v288 = vld [vmem:[%s244] sm:$0xff]
        %v289 = vld [vmem:[%s244 + $0x8] sm:$0xff]
        %v290 = vld [vmem:[%s244 + $0x10] sm:$0xff]
        %v291 = vld [vmem:[#allocation8] sm:$0xff]
        %v292 = vld [vmem:[#allocation8 + $0x8] sm:$0xff]
        %v293 = vld [vmem:[#allocation8 + $0x10] sm:$0xff]
        %v294 = vld [vmem:[#allocation8 + $0x18] sm:$0xff]
        %v295 = vld [vmem:[#allocation8 + $0x20] sm:$0xff]
        %v296 = vld [vmem:[#allocation8 + $0x28] sm:$0xff]
        %v297 = vld [vmem:[#allocation8 + $0x30] sm:$0xff]
        %v298 = vld [vmem:[#allocation8 + $0x38] sm:$0xff]
        %v299 = vld [vmem:[#allocation8 + $0x40] sm:$0xff]
        %v300 = vld [vmem:[#allocation8 + $0x48] sm:$0xff]
        %v301 = vld [vmem:[#allocation8 + $0x50] sm:$0xff]
        %v302 = vld [vmem:[#allocation8 + $0x58] sm:$0xff]
        %v303 = vld [vmem:[#allocation8 + $0x60] sm:$0xff]
        %v304 = vld [vmem:[#allocation8 + $0x68] sm:$0xff]
        %v305 = vld [vmem:[#allocation8 + $0x70] sm:$0xff]
        %v306 = vld [vmem:[#allocation8 + $0x78] sm:$0xff]
        %v307 = vld [vmem:[#allocation8 + $0x80] sm:$0xff]
        %v308 = vld [vmem:[#allocation8 + $0x88] sm:$0xff]
        %v309 = vld [vmem:[#allocation8 + $0x90] sm:$0xff]
        %v310 = vld [vmem:[#allocation8 + $0x98] sm:$0xff]
        %v311 = vld [vmem:[#allocation8 + $0xa0] sm:$0xff]
        %v312 = vld [vmem:[#allocation8 + $0xa8] sm:$0xff]
        %v313 = vld [vmem:[#allocation8 + $0xb0] sm:$0xff]
        %v314 = vld [vmem:[#allocation8 + $0xb8] sm:$0xff]
        %v315 = vld [vmem:[#allocation8 + $0xc0] sm:$0xff]
        %v316 = vld [vmem:[#allocation8 + $0xc8] sm:$0xff]
        %v317 = vld [vmem:[#allocation8 + $0xd0] sm:$0xff]
        %v318 = vld [vmem:[#allocation8 + $0xd8] sm:$0xff]
        %v319 = vld [vmem:[#allocation8 + $0xe0] sm:$0xff]
        %v320 = vld [vmem:[#allocation8 + $0xe8] sm:$0xff]
        %v321 = vld [vmem:[#allocation8 + $0xf0] sm:$0xff]
        %v322 = vld [vmem:[#allocation8 + $0xf8] sm:$0xff]
        %v323 = vld [vmem:[#allocation8 + $0x100] sm:$0xff]
        %v324 = vld [vmem:[#allocation8 + $0x108] sm:$0xff]
        %v325 = vld [vmem:[#allocation8 + $0x110] sm:$0xff]
        %v326 = vld [vmem:[#allocation8 + $0x118] sm:$0xff]
        %v327 = vld [vmem:[#allocation8 + $0x120] sm:$0xff]
        %v328 = vld [vmem:[#allocation8 + $0x128] sm:$0xff]
        %v329 = vld [vmem:[#allocation8 + $0x130] sm:$0xff]
        %v330 = vld [vmem:[#allocation8 + $0x138] sm:$0xff]
        %v331 = vld [vmem:[#allocation8 + $0x140] sm:$0xff]
        %v332 = vld [vmem:[#allocation8 + $0x148] sm:$0xff]
        %v333 = vld [vmem:[#allocation8 + $0x150] sm:$0xff]
        %v334 = vld [vmem:[#allocation8 + $0x158] sm:$0xff]
        %v335 = vld [vmem:[#allocation8 + $0x160] sm:$0xff]
        %v336 = vld [vmem:[#allocation8 + $0x168] sm:$0xff]
        %v337 = vld [vmem:[#allocation8 + $0x170] sm:$0xff]
        %v338 = vld [vmem:[#allocation8 + $0x178] sm:$0xff]
        %v339 = vld [vmem:[#allocation8 + $0x180] sm:$0xff]
        %v340 = vld [vmem:[#allocation8 + $0x188] sm:$0xff]
        %v341 = vld [vmem:[#allocation8 + $0x190] sm:$0xff]
        %v342 = vld [vmem:[#allocation8 + $0x198] sm:$0xff]
        %v343 = vld [vmem:[#allocation8 + $0x1a0] sm:$0xff]
        %v344 = vld [vmem:[#allocation8 + $0x1a8] sm:$0xff]
        %v345 = vld [vmem:[#allocation8 + $0x1b0] sm:$0xff]
        %v346 = vld [vmem:[#allocation8 + $0x1b8] sm:$0xff]
        %v347 = vld [vmem:[#allocation8 + $0x1c0] sm:$0xff]
        %v348 = vld [vmem:[#allocation8 + $0x1c8] sm:$0xff]
        %v349 = vld [vmem:[#allocation8 + $0x1d0] sm:$0xff]
        %v350 = vld [vmem:[#allocation8 + $0x1d8] sm:$0xff]
        %v351 = vld [vmem:[#allocation8 + $0x1e0] sm:$0xff]
        %v352 = vld [vmem:[#allocation8 + $0x1e8] sm:$0xff]
        %v353 = vld [vmem:[#allocation8 + $0x1f0] sm:$0xff]
        %v354 = vld [vmem:[#allocation8 + $0x1f8] sm:$0xff]
        %v355 = vld [vmem:[#allocation8 + $0x200] sm:$0xff]
        %v356 = vld [vmem:[#allocation8 + $0x208] sm:$0xff]
        %v357 = vld [vmem:[#allocation8 + $0x210] sm:$0xff]
        %v358 = vld [vmem:[#allocation8 + $0x218] sm:$0xff]
        %v359 = vld [vmem:[#allocation8 + $0x220] sm:$0xff]
        %v360 = vld [vmem:[#allocation8 + $0x228] sm:$0xff]
        %v361 = vld [vmem:[#allocation8 + $0x230] sm:$0xff]
        %v362 = vld [vmem:[#allocation8 + $0x238] sm:$0xff]
        %v363 = vld [vmem:[#allocation8 + $0x240] sm:$0xff]
        %v364 = vld [vmem:[#allocation8 + $0x248] sm:$0xff]
        %v365 = vld [vmem:[#allocation8 + $0x250] sm:$0xff]
        %v366 = vld [vmem:[#allocation8 + $0x258] sm:$0xff]
        %v367 = vld [vmem:[#allocation8 + $0x260] sm:$0xff]
        %v368 = vld [vmem:[#allocation8 + $0x268] sm:$0xff]
        %v369 = vld [vmem:[#allocation8 + $0x270] sm:$0xff]
        %v370 = vld [vmem:[#allocation8 + $0x278] sm:$0xff]
        %v371 = vld [vmem:[#allocation8 + $0x280] sm:$0xff]
        %v372 = vld [vmem:[#allocation8 + $0x288] sm:$0xff]
        %v373 = vld [vmem:[#allocation8 + $0x290] sm:$0xff]
        %v374 = vld [vmem:[#allocation8 + $0x298] sm:$0xff]
        %v375 = vld [vmem:[#allocation8 + $0x2a0] sm:$0xff]
        %v376 = vld [vmem:[#allocation8 + $0x2a8] sm:$0xff]
        %v377 = vld [vmem:[#allocation8 + $0x2b0] sm:$0xff]
        %v378 = vld [vmem:[#allocation8 + $0x2b8] sm:$0xff]
        %v379 = vld [vmem:[#allocation8 + $0x2c0] sm:$0xff]
        %v380 = vld [vmem:[#allocation8 + $0x2c8] sm:$0xff]
        %v381 = vld [vmem:[#allocation8 + $0x2d0] sm:$0xff]
        %v382 = vld [vmem:[#allocation8 + $0x2d8] sm:$0xff]
        %v383 = vld [vmem:[#allocation8 + $0x2e0] sm:$0xff]
        %v384 = vld [vmem:[#allocation8 + $0x2e8] sm:$0xff]
        %v385 = vld [vmem:[#allocation8 + $0x2f0] sm:$0xff]
        %v386 = vld [vmem:[#allocation8 + $0x2f8] sm:$0xff]
        %387 = vmatprep.subr.mxu0 %v382
        %388 = vmatpush1.msra.mxu0 %v381
        %389 = vmatprep.subr.mxu0 %v376
        %390 = vmatpush1.msra.mxu0 %v375
        %391 = vmatprep.subr.mxu0 %v370
        %392 = vmatpush1.msra.mxu0 %v369
        %393 = vmatprep.subr.mxu0 %v364
        %394 = vmatpush1.msra.mxu0 %v363
        %395 = vmatprep.subr.mxu0 %v358
        %396 = vmatpush1.msra.mxu0 %v357
        %397 = vmatprep.subr.mxu0 %v352
        %398 = vmatpush1.msra.mxu0 %v351
        %399 = vmatprep.subr.mxu0 %v346
        %400 = vmatpush1.msra.mxu0 %v345
        %401 = vmatprep.subr.mxu0 %v340
        %402 = vmatpush1.msra.mxu0 %v339
        %403 = vmatprep.subr.mxu0 %v334
        %404 = vmatpush1.msra.mxu0 %v333
        %405 = vmatprep.subr.mxu0 %v328
        %406 = vmatpush1.msra.mxu0 %v327
        %407 = vmatprep.subr.mxu0 %v322
        %408 = vmatpush1.msra.mxu0 %v321
        %409 = vmatprep.subr.mxu0 %v316
        %410 = vmatpush1.msra.mxu0 %v315
        %411 = vmatprep.subr.mxu0 %v310
        %412 = vmatpush1.msra.mxu0 %v309
        %413 = vmatprep.subr.mxu0 %v304
        %414 = vmatpush1.msra.mxu0 %v303
        %415 = vmatprep.subr.mxu0 %v298
        %416 = vmatpush1.msra.mxu0 %v297
        %417 = vmatprep.subr.mxu0 %v292
        %418 = vmatpush1.msra.mxu0 %v291
        %419 = vmatprep.subr.mxu0 0.0
        %420 = vmatpush2.msra.mxu0 0.0
        %421 = vmatprep.subr.mxu0 0.0
        %422 = vmatpush2.msra.mxu0 0.0
        %423 = vmatprep.subr.mxu0 0.0
        %424 = vmatpush2.msra.mxu0 0.0
        %425 = vmatprep.subr.mxu0 0.0
        %426 = vmatpush2.msra.mxu0 0.0
        %427 = vmatprep.subr.mxu0 0.0
        %428 = vmatpush2.msra.mxu0 0.0
        %429 = vmatprep.subr.mxu0 0.0
        %430 = vmatpush2.msra.mxu0 0.0
        %431 = vmatprep.subr.mxu0 0.0
        %432 = vmatpush2.msra.mxu0 0.0
        %433 = vmatprep.subr.mxu0 0.0
        %434 = vmatpush2.msra.mxu0 0.0
        %435 = vmatprep.subr.mxu0 0.0
        %436 = vmatpush2.msra.mxu0 0.0
        %437 = vmatprep.subr.mxu0 0.0
        %438 = vmatpush2.msra.mxu0 0.0
        %439 = vmatprep.subr.mxu0 0.0
        %440 = vmatpush2.msra.mxu0 0.0
        %441 = vmatprep.subr.mxu0 0.0
        %442 = vmatpush2.msra.mxu0 0.0
        %443 = vmatprep.subr.mxu0 0.0
        %444 = vmatpush2.msra.mxu0 0.0
        %445 = vmatprep.subr.mxu0 0.0
        %446 = vmatpush2.msra.mxu0 0.0
        %447 = vmatprep.subr.mxu0 0.0
        %448 = vmatpush2.msra.mxu0 0.0
        %449 = vmatprep.subr.mxu0 0.0
        %450 = vmatpush2.msra.mxu0 0.0
        %451 = vmatprep.mubr.f32.mxu0 0.0
        %452 = vmatmul.mubr.f32.gmra.mxu0 %v288
        %v453 = vpop.f32.mrf.mxu0
        %v454 = vadd.f32 0.0, %v453
        %v455 = vpop.f32.mrf.mxu0
        %v456 = vadd.f32 0.0, %v455
        %457 = vmatprep.mubr.f32.mxu0 0.0
        %458 = vmatmul.mubr.f32.gmra.mxu0 %v289
        %v459 = vpop.f32.mrf.mxu0
        %v460 = vadd.f32 0.0, %v459
        %v461 = vpop.f32.mrf.mxu0
        %v462 = vadd.f32 0.0, %v461
        %463 = vmatprep.mubr.f32.mxu0 0.0
        %464 = vmatmul.mubr.f32.gmra.mxu0 %v290
        %v465 = vpop.f32.mrf.mxu0
        %v466 = vadd.f32 0.0, %v465
        %v467 = vpop.f32.mrf.mxu0
        %v468 = vadd.f32 0.0, %v467
        %469 = vdwg.mxu0
        %470 = vmatprep.subr.mxu0 %v384
        %471 = vmatpush1.msra.mxu0 %v383
        %472 = vmatprep.subr.mxu0 %v378
        %473 = vmatpush1.msra.mxu0 %v377
        %474 = vmatprep.subr.mxu0 %v372
        %475 = vmatpush1.msra.mxu0 %v371
        %476 = vmatprep.subr.mxu0 %v366
        %477 = vmatpush1.msra.mxu0 %v365
        %478 = vmatprep.subr.mxu0 %v360
        %479 = vmatpush1.msra.mxu0 %v359
        %480 = vmatprep.subr.mxu0 %v354
        %481 = vmatpush1.msra.mxu0 %v353
        %482 = vmatprep.subr.mxu0 %v348
        %483 = vmatpush1.msra.mxu0 %v347
        %484 = vmatprep.subr.mxu0 %v342
        %485 = vmatpush1.msra.mxu0 %v341
        %486 = vmatprep.subr.mxu0 %v336
        %487 = vmatpush1.msra.mxu0 %v335
        %488 = vmatprep.subr.mxu0 %v330
        %489 = vmatpush1.msra.mxu0 %v329
        %490 = vmatprep.subr.mxu0 %v324
        %491 = vmatpush1.msra.mxu0 %v323
        %492 = vmatprep.subr.mxu0 %v318
        %493 = vmatpush1.msra.mxu0 %v317
        %494 = vmatprep.subr.mxu0 %v312
        %495 = vmatpush1.msra.mxu0 %v311
        %496 = vmatprep.subr.mxu0 %v306
        %497 = vmatpush1.msra.mxu0 %v305
        %498 = vmatprep.subr.mxu0 %v300
        %499 = vmatpush1.msra.mxu0 %v299
        %500 = vmatprep.subr.mxu0 %v294
        %501 = vmatpush1.msra.mxu0 %v293
        %502 = vmatprep.subr.mxu0 0.0
        %503 = vmatpush2.msra.mxu0 0.0
        %504 = vmatprep.subr.mxu0 0.0
        %505 = vmatpush2.msra.mxu0 0.0
        %506 = vmatprep.subr.mxu0 0.0
        %507 = vmatpush2.msra.mxu0 0.0
        %508 = vmatprep.subr.mxu0 0.0
        %509 = vmatpush2.msra.mxu0 0.0
        %510 = vmatprep.subr.mxu0 0.0
        %511 = vmatpush2.msra.mxu0 0.0
        %512 = vmatprep.subr.mxu0 0.0
        %513 = vmatpush2.msra.mxu0 0.0
        %514 = vmatprep.subr.mxu0 0.0
        %515 = vmatpush2.msra.mxu0 0.0
        %516 = vmatprep.subr.mxu0 0.0
        %517 = vmatpush2.msra.mxu0 0.0
        %518 = vmatprep.subr.mxu0 0.0
        %519 = vmatpush2.msra.mxu0 0.0
        %520 = vmatprep.subr.mxu0 0.0
        %521 = vmatpush2.msra.mxu0 0.0
        %522 = vmatprep.subr.mxu0 0.0
        %523 = vmatpush2.msra.mxu0 0.0
        %524 = vmatprep.subr.mxu0 0.0
        %525 = vmatpush2.msra.mxu0 0.0
        %526 = vmatprep.subr.mxu0 0.0
        %527 = vmatpush2.msra.mxu0 0.0
        %528 = vmatprep.subr.mxu0 0.0
        %529 = vmatpush2.msra.mxu0 0.0
        %530 = vmatprep.subr.mxu0 0.0
        %531 = vmatpush2.msra.mxu0 0.0
        %532 = vmatprep.subr.mxu0 0.0
        %533 = vmatpush2.msra.mxu0 0.0
        %534 = vmatprep.mubr.f32.mxu0 0.0
        %535 = vmatmul.mubr.f32.gmra.mxu0 %v288
        %v536 = vpop.f32.mrf.mxu0
        %v537 = vadd.f32 0.0, %v536
        %v538 = vpop.f32.mrf.mxu0
        %v539 = vadd.f32 0.0, %v538
        %540 = vmatprep.mubr.f32.mxu0 0.0
        %541 = vmatmul.mubr.f32.gmra.mxu0 %v289
        %v542 = vpop.f32.mrf.mxu0
        %v543 = vadd.f32 0.0, %v542
        %v544 = vpop.f32.mrf.mxu0
        %v545 = vadd.f32 0.0, %v544
        %546 = vmatprep.mubr.f32.mxu0 0.0
        %547 = vmatmul.mubr.f32.gmra.mxu0 %v290
        %v548 = vpop.f32.mrf.mxu0
        %v549 = vadd.f32 0.0, %v548
        %v550 = vpop.f32.mrf.mxu0
        %v551 = vadd.f32 0.0, %v550
        %552 = vdwg.mxu0
        %553 = vmatprep.subr.mxu0 %v386
        %554 = vmatpush1.msra.mxu0 %v385
        %555 = vmatprep.subr.mxu0 %v380
        %556 = vmatpush1.msra.mxu0 %v379
        %557 = vmatprep.subr.mxu0 %v374
        %558 = vmatpush1.msra.mxu0 %v373
        %559 = vmatprep.subr.mxu0 %v368
        %560 = vmatpush1.msra.mxu0 %v367
        %561 = vmatprep.subr.mxu0 %v362
        %562 = vmatpush1.msra.mxu0 %v361
        %563 = vmatprep.subr.mxu0 %v356
        %564 = vmatpush1.msra.mxu0 %v355
        %565 = vmatprep.subr.mxu0 %v350
        %566 = vmatpush1.msra.mxu0 %v349
        %567 = vmatprep.subr.mxu0 %v344
        %568 = vmatpush1.msra.mxu0 %v343
        %569 = vmatprep.subr.mxu0 %v338
        %570 = vmatpush1.msra.mxu0 %v337
        %571 = vmatprep.subr.mxu0 %v332
        %572 = vmatpush1.msra.mxu0 %v331
        %573 = vmatprep.subr.mxu0 %v326
        %574 = vmatpush1.msra.mxu0 %v325
        %575 = vmatprep.subr.mxu0 %v320
        %576 = vmatpush1.msra.mxu0 %v319
        %577 = vmatprep.subr.mxu0 %v314
        %578 = vmatpush1.msra.mxu0 %v313
        %579 = vmatprep.subr.mxu0 %v308
        %580 = vmatpush1.msra.mxu0 %v307
        %581 = vmatprep.subr.mxu0 %v302
        %582 = vmatpush1.msra.mxu0 %v301
        %583 = vmatprep.subr.mxu0 %v296
        %584 = vmatpush1.msra.mxu0 %v295
        %585 = vmatprep.subr.mxu0 0.0
        %586 = vmatpush2.msra.mxu0 0.0
        %587 = vmatprep.subr.mxu0 0.0
        %588 = vmatpush2.msra.mxu0 0.0
        %589 = vmatprep.subr.mxu0 0.0
        %590 = vmatpush2.msra.mxu0 0.0
        %591 = vmatprep.subr.mxu0 0.0
        %592 = vmatpush2.msra.mxu0 0.0
        %593 = vmatprep.subr.mxu0 0.0
        %594 = vmatpush2.msra.mxu0 0.0
        %595 = vmatprep.subr.mxu0 0.0
        %596 = vmatpush2.msra.mxu0 0.0
        %597 = vmatprep.subr.mxu0 0.0
        %598 = vmatpush2.msra.mxu0 0.0
        %599 = vmatprep.subr.mxu0 0.0
        %600 = vmatpush2.msra.mxu0 0.0
        %601 = vmatprep.subr.mxu0 0.0
        %602 = vmatpush2.msra.mxu0 0.0
        %603 = vmatprep.subr.mxu0 0.0
        %604 = vmatpush2.msra.mxu0 0.0
        %605 = vmatprep.subr.mxu0 0.0
        %606 = vmatpush2.msra.mxu0 0.0
        %607 = vmatprep.subr.mxu0 0.0
        %608 = vmatpush2.msra.mxu0 0.0
        %609 = vmatprep.subr.mxu0 0.0
        %610 = vmatpush2.msra.mxu0 0.0
        %611 = vmatprep.subr.mxu0 0.0
        %612 = vmatpush2.msra.mxu0 0.0
        %613 = vmatprep.subr.mxu0 0.0
        %614 = vmatpush2.msra.mxu0 0.0
        %615 = vmatprep.subr.mxu0 0.0
        %616 = vmatpush2.msra.mxu0 0.0
        %617 = vmatprep.mubr.f32.mxu0 0.0
        %618 = vmatmul.mubr.f32.gmra.mxu0 %v288
        %v619 = vpop.f32.mrf.mxu0
        %v620 = vadd.f32 0.0, %v619
        %v621 = vpop.f32.mrf.mxu0
        %v622 = vadd.f32 0.0, %v621
        %623 = vmatprep.mubr.f32.mxu0 0.0
        %624 = vmatmul.mubr.f32.gmra.mxu0 %v289
        %v625 = vpop.f32.mrf.mxu0
        %v626 = vadd.f32 0.0, %v625
        %v627 = vpop.f32.mrf.mxu0
        %v628 = vadd.f32 0.0, %v627
        %629 = vmatprep.mubr.f32.mxu0 0.0
        %630 = vmatmul.mubr.f32.gmra.mxu0 %v290
        %v631 = vpop.f32.mrf.mxu0
        %v632 = vadd.f32 0.0, %v631
        %v633 = vpop.f32.mrf.mxu0
        %v634 = vadd.f32 0.0, %v633
        %635 = vdwg.mxu0
        %636 = vst [vmem:[#allocation2] sm:$0xff] %v454
        %637 = vst [vmem:[#allocation2 + $0x8] sm:$0xff] %v456
        %638 = vst [vmem:[#allocation2 + $0x10] sm:$0xff] %v460
        %639 = vst [vmem:[#allocation2 + $0x18] sm:$0xff] %v462
        %640 = vst [vmem:[#allocation2 + $0x20] sm:$0xff] %v466
        %641 = vst [vmem:[#allocation2 + $0x28] sm:$0xff] %v468
        %642 = vst [vmem:[#allocation2 + $0x30] sm:$0xff] %v537
        %643 = vst [vmem:[#allocation2 + $0x38] sm:$0xff] %v539
        %644 = vst [vmem:[#allocation2 + $0x40] sm:$0xff] %v543
        %645 = vst [vmem:[#allocation2 + $0x48] sm:$0xff] %v545
        %646 = vst [vmem:[#allocation2 + $0x50] sm:$0xff] %v549
        %647 = vst [vmem:[#allocation2 + $0x58] sm:$0xff] %v551
        %648 = vst [vmem:[#allocation2 + $0x60] sm:$0xff] %v620
        %649 = vst [vmem:[#allocation2 + $0x68] sm:$0xff] %v622
        %650 = vst [vmem:[#allocation2 + $0x70] sm:$0xff] %v626
        %651 = vst [vmem:[#allocation2 + $0x78] sm:$0xff] %v628
        %652 = vst [vmem:[#allocation2 + $0x80] sm:$0xff] %v632
        %653 = vst [vmem:[#allocation2 + $0x88] sm:$0xff] %v634
        %v654 = vld [vmem:[#allocation6] sm:$0xff]
        %v655 = vld [vmem:[#allocation6 + $0x8] sm:$0xff]
        %v656 = vld [vmem:[#allocation6 + $0x10] sm:$0xff]
        %v657 = vld [vmem:[#allocation6 + $0x18] sm:$0xff]
        %v658 = vld [vmem:[#allocation2] sm:$0xff]
        %v659 = vld [vmem:[#allocation2 + $0x8] sm:$0xff]
        %v660 = vld [vmem:[#allocation2 + $0x10] sm:$0xff]
        %v661 = vld [vmem:[#allocation2 + $0x18] sm:$0xff]
        %v662 = vld [vmem:[#allocation2 + $0x20] sm:$0xff]
        %v663 = vld [vmem:[#allocation2 + $0x28] sm:$0xff]
        %v664 = vld [vmem:[#allocation2 + $0x30] sm:$0xff]
        %v665 = vld [vmem:[#allocation2 + $0x38] sm:$0xff]
        %v666 = vld [vmem:[#allocation2 + $0x40] sm:$0xff]
        %v667 = vld [vmem:[#allocation2 + $0x48] sm:$0xff]
        %v668 = vld [vmem:[#allocation2 + $0x50] sm:$0xff]
        %v669 = vld [vmem:[#allocation2 + $0x58] sm:$0xff]
        %v670 = vld [vmem:[#allocation2 + $0x60] sm:$0xff]
        %v671 = vld [vmem:[#allocation2 + $0x68] sm:$0xff]
        %v672 = vld [vmem:[#allocation2 + $0x70] sm:$0xff]
        %v673 = vld [vmem:[#allocation2 + $0x78] sm:$0xff]
        %v674 = vld [vmem:[#allocation2 + $0x80] sm:$0xff]
        %v675 = vld [vmem:[#allocation2 + $0x88] sm:$0xff]
        %v676 = vld [vmem:[%s285] sm:$0x3]
        %v678 = vlaneseq
        %v679 = vshrl.u32 %v678, 7
        %v680 = vsub.s32 0, %v679
        %v681 = vrot.slane %v676, %v680
        %v682 = vlaneseq
        %v683 = vshrl.u32 %v682, 7
        %v684 = vsub.s32 1, %v683
        %v685 = vrot.slane %v676, %v684
        %vm688 = vcmask 588800
        %v690 = vsel %vm688, %v654, 0
        %v693 = vsel %vm688, %v655, 0
        %v696 = vsel %vm688, %v656, 0
        %v699 = vsel %vm688, %v657, 0
        %701 = vmatprep.subr.mxu0 0.0
        %702 = vmatpush1.msra.mxu0 0.0
        %703 = vmatprep.subr.mxu0 0.0
        %704 = vmatpush1.msra.mxu0 0.0
        %705 = vmatprep.subr.mxu0 0.0
        %706 = vmatpush1.msra.mxu0 0.0
        %707 = vmatprep.subr.mxu0 0.0
        %708 = vmatpush1.msra.mxu0 0.0
        %709 = vmatprep.subr.mxu0 0.0
        %710 = vmatpush1.msra.mxu0 0.0
        %711 = vmatprep.subr.mxu0 0.0
        %712 = vmatpush1.msra.mxu0 0.0
        %713 = vmatprep.subr.mxu0 0.0
        %714 = vmatpush1.msra.mxu0 0.0
        %715 = vmatprep.subr.mxu0 %v675
        %716 = vmatpush1.msra.mxu0 %v674
        %717 = vmatprep.subr.mxu0 %v673
        %718 = vmatpush1.msra.mxu0 %v672
        %719 = vmatprep.subr.mxu0 %v671
        %720 = vmatpush1.msra.mxu0 %v670
        %721 = vmatprep.subr.mxu0 %v669
        %722 = vmatpush1.msra.mxu0 %v668
        %723 = vmatprep.subr.mxu0 %v667
        %724 = vmatpush1.msra.mxu0 %v666
        %725 = vmatprep.subr.mxu0 %v665
        %726 = vmatpush1.msra.mxu0 %v664
        %727 = vmatprep.subr.mxu0 %v663
        %728 = vmatpush1.msra.mxu0 %v662
        %729 = vmatprep.subr.mxu0 %v661
        %730 = vmatpush1.msra.mxu0 %v660
        %731 = vmatprep.subr.mxu0 %v659
        %732 = vmatpush1.msra.mxu0 %v658
        %733 = vmatprep.subr.mxu0 0.0
        %734 = vmatpush2.msra.mxu0 0.0
        %735 = vmatprep.subr.mxu0 0.0
        %736 = vmatpush2.msra.mxu0 0.0
        %737 = vmatprep.subr.mxu0 0.0
        %738 = vmatpush2.msra.mxu0 0.0
        %739 = vmatprep.subr.mxu0 0.0
        %740 = vmatpush2.msra.mxu0 0.0
        %741 = vmatprep.subr.mxu0 0.0
        %742 = vmatpush2.msra.mxu0 0.0
        %743 = vmatprep.subr.mxu0 0.0
        %744 = vmatpush2.msra.mxu0 0.0
        %745 = vmatprep.subr.mxu0 0.0
        %746 = vmatpush2.msra.mxu0 0.0
        %747 = vmatprep.subr.mxu0 0.0
        %748 = vmatpush2.msra.mxu0 0.0
        %749 = vmatprep.subr.mxu0 0.0
        %750 = vmatpush2.msra.mxu0 0.0
        %751 = vmatprep.subr.mxu0 0.0
        %752 = vmatpush2.msra.mxu0 0.0
        %753 = vmatprep.subr.mxu0 0.0
        %754 = vmatpush2.msra.mxu0 0.0
        %755 = vmatprep.subr.mxu0 0.0
        %756 = vmatpush2.msra.mxu0 0.0
        %757 = vmatprep.subr.mxu0 0.0
        %758 = vmatpush2.msra.mxu0 0.0
        %759 = vmatprep.subr.mxu0 0.0
        %760 = vmatpush2.msra.mxu0 0.0
        %761 = vmatprep.subr.mxu0 0.0
        %762 = vmatpush2.msra.mxu0 0.0
        %763 = vmatprep.subr.mxu0 0.0
        %764 = vmatpush2.msra.mxu0 0.0
        %765 = vmatprep.mubr.f32.mxu0 0.0
        %766 = vmatmul.mubr.f32.gmra.mxu0 %v690
        %v767 = vpop.f32.mrf.mxu0
        %v768 = vadd.f32 %v681, %v767
        %v769 = vpop.f32.mrf.mxu0
        %v770 = vadd.f32 %v685, %v769
        %771 = vmatprep.mubr.f32.mxu0 0.0
        %772 = vmatmul.mubr.f32.gmra.mxu0 %v693
        %v773 = vpop.f32.mrf.mxu0
        %v774 = vadd.f32 %v681, %v773
        %v775 = vpop.f32.mrf.mxu0
        %v776 = vadd.f32 %v685, %v775
        %777 = vmatprep.mubr.f32.mxu0 0.0
        %778 = vmatmul.mubr.f32.gmra.mxu0 %v696
        %v779 = vpop.f32.mrf.mxu0
        %v780 = vadd.f32 %v681, %v779
        %v781 = vpop.f32.mrf.mxu0
        %v782 = vadd.f32 %v685, %v781
        %783 = vmatprep.mubr.f32.mxu0 0.0
        %784 = vmatmul.mubr.f32.gmra.mxu0 %v699
        %v785 = vpop.f32.mrf.mxu0
        %v786 = vadd.f32 %v681, %v785
        %v787 = vpop.f32.mrf.mxu0
        %v788 = vadd.f32 %v685, %v787
        %789 = vdwg.mxu0
        %790 = vst [vmem:[%s280] sm:$0xff] %v768
        %791 = vst [vmem:[%s280 + $0x8] sm:$0xff] %v770
        %792 = vst [vmem:[%s280 + $0x10] sm:$0xff] %v774
        %793 = vst [vmem:[%s280 + $0x18] sm:$0xff] %v776
        %794 = vst [vmem:[%s280 + $0x20] sm:$0xff] %v780
        %795 = vst [vmem:[%s280 + $0x28] sm:$0xff] %v782
        %796 = vst [vmem:[%s280 + $0x30] sm:$0xff] %v786
        %797 = vst [vmem:[%s280 + $0x38] sm:$0xff] %v788
        %s798 = sand.u32 %s143, 1
        %s799 = scalar_lea.sflag [#allocation5], %s798
        %s800 = sand.u32 %s143, 1
        %s801 = smul.addr %s800, 64
        %s802 = scalar_lea.vmem [#allocation9], %s801
        // Predicated region
        $region49: #{tpu_custom_call.1} parent=35 // pred_check
          %p803 = pneg %p153
        $region50: #{tpu_custom_call.1} parent=35 // pred_check_branch
          %805 = sbr.rel (%p803) target = $region52
        $region51: #{tpu_custom_call.1} parent=35 // pred_region
          %s806 = smul.u32 2, %s27
          %s808 = ssub.s32 1024, 1024
          %809 = vsyncadd %s799, %s808
          %s810 = smul.addr %s26, 8
          %s811 = sadd.s32 %s806, %s810
          %s812 = smul.addr %s811, 128
          %s813 = scalar_lea.hbm %s4, %s812
          %s814 = sshll.u32 %s802, 4
          %s815 = int_to_ptr.vmem [resolvable:$true] %s814
          %820 = dma.vmem_to_hbm [thread:$0]  %s815, 1024, %s813, %s799, 256, 256, 16
        $region52: #{tpu_custom_call.1} parent=35 // pred_fallthru
          _
      $region36: #{tpu_custom_call.1} parent=5 // pred_fallthru
        _
      %p821 = scmp.le.s32.totalorder 2, %s17
      // Predicated region
      $region53: #{tpu_custom_call.1} parent=5 // pred_check
        %p822 = pneg %p821
      $region54: #{tpu_custom_call.1} parent=5 // pred_check_branch
        %824 = sbr.rel (%p822) target = $region56
      $region55: #{tpu_custom_call.1} parent=5 // pred_region
        %s825 = ssub.s32 %s17, 2
        // Predicated region
        $region57: #{tpu_custom_call.1} parent=55 // pred_check
          %p826 = pneg %p159
        $region58: #{tpu_custom_call.1} parent=55 // pred_check_branch
          %828 = sbr.rel (%p826) target = $region60
        $region59: #{tpu_custom_call.1} parent=55 // pred_region
          %s829 = sand.u32 %s144, 1
          %s830 = scalar_lea.sflag [#allocation5], %s829
          %s831 = sand.u32 %s144, 1
          %s832 = smul.addr %s831, 64
          %s833 = scalar_lea.vmem [#allocation9], %s832
          %834 = dma.done %s830, 1024
        $region60: #{tpu_custom_call.1} parent=55 // pred_fallthru
          _
      $region56: #{tpu_custom_call.1} parent=5 // pred_fallthru
        _
    $region6: #{tpu_custom_call.1} parent=1 // loop_footer
      %s21 = sadd.s32 1, %s17
    $region7: #{tpu_custom_call.1} parent=1 // loop_footer_branch
      %16 = sbr.rel target = $region3
    $region8: #{tpu_custom_call.1} parent=1 // loop_exit
      _
    %835 = vsyncpa [#allocation4], 1
    %s836 = scalar_lea.sflag [#allocation4], 1
    %837 = vsyncpa %s836, 1
    %838 = vsyncpa [#allocation7], 1
    %839 = vsyncpa [#allocation5], 1
    %s840 = scalar_lea.sflag [#allocation5], 1
    %841 = vsyncpa %s840, 1

// kernel: tpu_custom_call.1
$region0: #{tpu_custom_call.1}
  #allocation0 [shape = 'u32[]', space=smem, size = 0x4, offset = 0x4, fixed_abs, tag = 'smem constant byte address 0x4 - core index']
  #allocation1 [shape = 'u32[144,128]{1,0:T(1,128)}', space=vmem, size = 0x12000, scoped, tag = 'internal scratch']
  #allocation2 [shape = 'f32[72,256]{1,0:T(8,128)}', space=vmem, size = 0x12000, scoped, tag = 'scratch operand']
  %s0 = inlined_call_operand.hbm [shape: f32[2,24,128], index: 0, kind: input, shape index: {}]
  %s1 = inlined_call_operand.hbm [shape: f32[32,72], index: 1, kind: input, shape index: {}]
  %s2 = inlined_call_operand.hbm [shape: f32[128,768], index: 2, kind: input, shape index: {}]
  %s3 = inlined_call_operand.vmem [shape: f32[1,256], index: 3, kind: input, shape index: {}]
  %s4 = inlined_call_operand.hbm [shape: f32[2,32,256], index: 4, kind: output, shape index: {}]
  %s5 = sld [smem:[#allocation0]]
  $region61: #{tpu_custom_call.1} parent=0
    _
  %s7 = ssub.s32 1, %s5
  %s8 = scalar_select 0, %s7, %s5
  $region1: #{tpu_custom_call.1} parent=0
    #allocation3 [shape = 'u8[24576]{0}', space=vmem, size = 0x6000, scoped, tag = 'input window, operand 0']
    #allocation4 [shape = 's32[2]{0}', space=sflag, size = 0x8, scoped, tag = 'scoped memory for tpu_custom_call.1']
    #allocation5 [shape = 's32[2]{0}', space=sflag, size = 0x8, scoped, tag = 'scoped memory for tpu_custom_call.1']
    #allocation6 [shape = 'u8[16384]{0}', space=vmem, size = 0x4000, scoped, tag = 'input window, operand 1, single buffered']
    #allocation7 [shape = 's32[1]{0}', space=sflag, size = 0x4, scoped, tag = 'scoped memory for tpu_custom_call.1']
    #allocation8 [shape = 'u8[393216]{0}', space=vmem, size = 0x60000, scoped, tag = 'input window, operand 2, single buffered']
    #allocation9 [shape = 'u8[65536]{0}', space=vmem, size = 0x10000, scoped, tag = 'output window, operand 0']
    %9 = vsyncpa [#allocation4], 0
    %s10 = scalar_lea.sflag [#allocation4], 1
    %11 = vsyncpa %s10, 0
    %12 = vsyncpa [#allocation7], 0
    %13 = vsyncpa [#allocation5], 0
    %s14 = scalar_lea.sflag [#allocation5], 1
    %15 = vsyncpa %s14, 0
    loop: start=0, step=1, limit=4
    $region2: #{tpu_custom_call.1} parent=1 // loop_pre_header
      _
    $region3: #{tpu_custom_call.1} parent=1 // loop_header
      %s17 = sphi 0, %s21
      %p18 = scmp.ge.s32.totalorder %s17, 4
      %s24 = sphi 0, %s36
      %s25 = sphi 0, %s32
      %s26 = sphi 0, %s24
      %s27 = sphi 0, %s25
      %s28 = sphi 0, %s26
      %s29 = sphi 0, %s27
      %s39 = sphi 0, %s41
      %s42 = sphi 0, %s39
      %s43 = sphi 0, %s42
      %s59 = sphi 0, %s43
      %s63 = sphi 0, %s63
      %s65 = sphi 0, %s63
      %s66 = sphi 0, %s65
      %s80 = sphi 0, %s66
      %s86 = sphi 0, %s88
      %s89 = sphi 0, %s86
      %s90 = sphi 0, %s89
      %s106 = sphi 0, %s90
      %s112 = sphi 0, %s114
      %s115 = sphi 0, %s112
      %s116 = sphi 0, %s115
      %s132 = sphi 0, %s116
      %s140 = sphi 0, %s142
      %s143 = sphi 0, %s140
      %s144 = sphi 0, %s143
      %s160 = sphi 0, %s144
    $region4: #{tpu_custom_call.1} parent=1 // loop_header_branch
      %20 = sbr.rel (%p18) target = $region8
    $region5: #{tpu_custom_call.1} parent=1 // loop_body
      %s22 = ssub.s32 %s17, 1
      %s23 = ssub.s32 %s17, 2
      %s30 = sadd.s32 1, %s25
      %p31 = scmp.ge.s32.totalorder %s30, 1
      %s32 = scalar_select %p31, 0, %s30
      %s33 = sadd.s32 1, %s24
      %s34 = scalar_select %p31, %s33, %s24
      %p35 = scmp.ge.s32.totalorder %s34, 2
      %s36 = scalar_select %p35, 0, %s34
      %s37 = ssub.s32 %s24, %s36
      %p38 = scmp.eq.s32.totalorder %s37, 0
      %s40 = sadd.s32 %s39, 1
      %s41 = scalar_select %p38, %s39, %s40
      %p44 = pneg %p38
      %p45 = scmp.eq.s32.totalorder %s17, 1
      %p46 = por %p44, %p45
      %p47 = scmp.ne.s32.totalorder %s39, %s42
      %p48 = scmp.eq.s32.totalorder %s17, 0
      %p49 = por %p47, %p48
      %p50 = scmp.ne.s32.totalorder %s39, %s42
      %p51 = scmp.eq.s32.totalorder %s22, 1
      %p52 = por %p50, %p51
      %p53 = scmp.ne.s32.totalorder %s42, %s43
      %p54 = scmp.eq.s32.totalorder %s22, 0
      %p55 = por %p53, %p54
      %p56 = scmp.ne.s32.totalorder %s42, %s43
      %p57 = scmp.eq.s32.totalorder %s23, 1
      %p58 = por %p56, %p57
      %p60 = scmp.ne.s32.totalorder %s43, %s59
      %p61 = scmp.eq.s32.totalorder %s23, 0
      %p62 = por %p60, %p61
      %s64 = sadd.s32 %s63, 1
      %p67 = scmp.eq.s32.totalorder %s17, 1
      %p68 = scmp.ne.s32.totalorder %s63, %s65
      %p69 = scmp.eq.s32.totalorder %s17, 0
      %p70 = por %p68, %p69
      %p71 = scmp.ne.s32.totalorder %s63, %s65
      %p72 = scmp.eq.s32.totalorder %s22, 1
      %p73 = por %p71, %p72
      %p74 = scmp.ne.s32.totalorder %s65, %s66
      %p75 = scmp.eq.s32.totalorder %s22, 0
      %p76 = por %p74, %p75
      %p77 = scmp.ne.s32.totalorder %s65, %s66
      %p78 = scmp.eq.s32.totalorder %s23, 1
      %p79 = por %p77, %p78
      %p81 = scmp.ne.s32.totalorder %s66, %s80
      %p82 = scmp.eq.s32.totalorder %s23, 0
      %p83 = por %p81, %p82
      %s84 = ssub.s32 %s25, %s32
      %p85 = scmp.eq.s32.totalorder %s84, 0
      %s87 = sadd.s32 %s86, 1
      %s88 = scalar_select %p85, %s86, %s87
      %p91 = pneg %p85
      %p92 = scmp.eq.s32.totalorder %s17, 1
      %p93 = por %p91, %p92
      %p94 = scmp.ne.s32.totalorder %s86, %s89
      %p95 = scmp.eq.s32.totalorder %s17, 0
      %p96 = por %p94, %p95
      %p97 = scmp.ne.s32.totalorder %s86, %s89
      %p98 = scmp.eq.s32.totalorder %s22, 1
      %p99 = por %p97, %p98
      %p100 = scmp.ne.s32.totalorder %s89, %s90
      %p101 = scmp.eq.s32.totalorder %s22, 0
      %p102 = por %p100, %p101
      %p103 = scmp.ne.s32.totalorder %s89, %s90
      %p104 = scmp.eq.s32.totalorder %s23, 1
      %p105 = por %p103, %p104
      %p107 = scmp.ne.s32.totalorder %s90, %s106
      %p108 = scmp.eq.s32.totalorder %s23, 0
      %p109 = por %p107, %p108
      %s110 = ssub.s32 %s25, %s32
      %p111 = scmp.eq.s32.totalorder %s110, 0
      %s113 = sadd.s32 %s112, 1
      %s114 = scalar_select %p111, %s112, %s113
      %p117 = pneg %p111
      %p118 = scmp.eq.s32.totalorder %s17, 1
      %p119 = por %p117, %p118
      %p120 = scmp.ne.s32.totalorder %s112, %s115
      %p121 = scmp.eq.s32.totalorder %s17, 0
      %p122 = por %p120, %p121
      %p123 = scmp.ne.s32.totalorder %s112, %s115
      %p124 = scmp.eq.s32.totalorder %s22, 1
      %p125 = por %p123, %p124
      %p126 = scmp.ne.s32.totalorder %s115, %s116
      %p127 = scmp.eq.s32.totalorder %s22, 0
      %p128 = por %p126, %p127
      %p129 = scmp.ne.s32.totalorder %s115, %s116
      %p130 = scmp.eq.s32.totalorder %s23, 1
      %p131 = por %p129, %p130
      %p133 = scmp.ne.s32.totalorder %s116, %s132
      %p134 = scmp.eq.s32.totalorder %s23, 0
      %p135 = por %p133, %p134
      %s136 = ssub.s32 %s24, %s36
      %s137 = ssub.s32 %s25, %s32
      %s138 = sor.u32 %s136, %s137
      %p139 = scmp.eq.s32.totalorder %s138, 0
      %s141 = sadd.s32 %s140, 1
      %s142 = scalar_select %p139, %s140, %s141
      %p145 = pneg %p139
      %p146 = scmp.eq.s32.totalorder %s17, 1
      %p147 = por %p145, %p146
      %p148 = scmp.ne.s32.totalorder %s140, %s143
      %p149 = scmp.eq.s32.totalorder %s17, 0
      %p150 = por %p148, %p149
      %p151 = scmp.ne.s32.totalorder %s140, %s143
      %p152 = scmp.eq.s32.totalorder %s22, 1
      %p153 = por %p151, %p152
      %p154 = scmp.ne.s32.totalorder %s143, %s144
      %p155 = scmp.eq.s32.totalorder %s22, 0
      %p156 = por %p154, %p155
      %p157 = scmp.ne.s32.totalorder %s143, %s144
      %p158 = scmp.eq.s32.totalorder %s23, 1
      %p159 = por %p157, %p158
      %p161 = scmp.ne.s32.totalorder %s144, %s160
      %p162 = scmp.eq.s32.totalorder %s23, 0
      %p163 = por %p161, %p162
      %p164 = scmp.le.s32.totalorder 1, %s17
      %p165 = scmp.lt.s32.totalorder %s17, 3
      %p166 = pnand %p164, %p165
      %p167 = pneg %p166
      // Predicated region
      $region9: #{tpu_custom_call.1} parent=5 // pred_check
        _
      $region10: #{tpu_custom_call.1} parent=5 // pred_check_branch
        %169 = sbr.rel (%p166) target = $region12
      $region11: #{tpu_custom_call.1} parent=5 // pred_region
        %s170 = ssub.s32 %s17, 1
        // Predicated region
        $region13: #{tpu_custom_call.1} parent=11 // pred_check
          %p171 = pneg %p76
        $region14: #{tpu_custom_call.1} parent=11 // pred_check_branch
          %173 = sbr.rel (%p171) target = $region16
        $region15: #{tpu_custom_call.1} parent=11 // pred_region
          %s175 = ssub.s32 512, 512
          %176 = vsyncadd [#allocation7], %s175
          %s177 = sshll.u32 [#allocation6], 4
          %s178 = int_to_ptr.vmem [resolvable:$true] %s177
          %183 = dma.hbm_to_vmem [thread:$0]  %s1, 512, %s178, [#allocation7], 128, 128, 8
        $region16: #{tpu_custom_call.1} parent=11 // pred_fallthru
          _
        // Predicated region
        $region17: #{tpu_custom_call.1} parent=11 // pred_check
          %p184 = pneg %p102
        $region18: #{tpu_custom_call.1} parent=11 // pred_check_branch
          %186 = sbr.rel (%p184) target = $region20
        $region19: #{tpu_custom_call.1} parent=11 // pred_region
          %s187 = smul.u32 6, %s27
          %s189 = ssub.s32 12288, 12288
          %190 = vsyncadd [#allocation7], %s189
          %s191 = smul.addr %s187, 128
          %s192 = scalar_lea.hbm %s2, %s191
          %s193 = sshll.u32 [#allocation8], 4
          %s194 = int_to_ptr.vmem [resolvable:$true] %s193
          %199 = dma.hbm_to_vmem [thread:$0]  %s192, 12288, %s194, [#allocation7], 768, 768, 48
        $region20: #{tpu_custom_call.1} parent=11 // pred_fallthru
          _
        // Predicated region
        $region21: #{tpu_custom_call.1} parent=11 // pred_check
          %p200 = pneg %p128
        $region22: #{tpu_custom_call.1} parent=11 // pred_check_branch
          %202 = sbr.rel (%p200) target = $region24
        $region23: #{tpu_custom_call.1} parent=11 // pred_region
          %s203 = smul.u32 2, %s27
          %p204 = scmp.lt.s32.totalorder %s203, 1
          %s205 = scalar_select %p204, %s203, 1
          %s206 = scalar_lea.vmem %s3, %s205
          %s207 = smul.u32 2, %s27
        $region24: #{tpu_custom_call.1} parent=11 // pred_fallthru
          _
      $region12: #{tpu_custom_call.1} parent=5 // pred_fallthru
        _
      %p208 = scmp.lt.s32.totalorder %s17, 2
      // Predicated region
      $region25: #{tpu_custom_call.1} parent=5 // pred_check
        %p209 = pneg %p208
      $region26: #{tpu_custom_call.1} parent=5 // pred_check_branch
        %211 = sbr.rel (%p209) target = $region28
      $region27: #{tpu_custom_call.1} parent=5 // pred_region
        // Predicated region
        $region29: #{tpu_custom_call.1} parent=27 // pred_check
          %p212 = pneg %p49
        $region30: #{tpu_custom_call.1} parent=27 // pred_check_branch
          %214 = sbr.rel (%p212) target = $region32
        $region31: #{tpu_custom_call.1} parent=27 // pred_region
          %s215 = sand.u32 %s39, 1
          %s216 = scalar_lea.sflag [#allocation4], %s215
          %s217 = sand.u32 %s39, 1
          %s218 = smul.addr %s217, 24
          %s219 = scalar_lea.vmem [#allocation3], %s218
          %s221 = ssub.s32 384, 384
          %222 = vsyncadd %s216, %s221
          %s223 = smul.addr %s24, 3
          %s224 = smul.addr %s223, 128
          %s225 = scalar_lea.hbm %s0, %s224
          %s226 = sshll.u32 %s219, 4
          %s227 = int_to_ptr.vmem [resolvable:$true] %s226
          %232 = dma.hbm_to_vmem [thread:$0]  %s225, 384, %s227, %s216, 128, 128, 8
        $region32: #{tpu_custom_call.1} parent=27 // pred_fallthru
          _
      $region28: #{tpu_custom_call.1} parent=5 // pred_fallthru
        _
      %p233 = scmp.le.s32.totalorder 1, %s17
      %p234 = scmp.lt.s32.totalorder %s17, 3
      %p235 = pnand %p233, %p234
      %p236 = pneg %p235
      // Predicated region
      $region33: #{tpu_custom_call.1} parent=5 // pred_check
        _
      $region34: #{tpu_custom_call.1} parent=5 // pred_check_branch
        %238 = sbr.rel (%p235) target = $region36
      $region35: #{tpu_custom_call.1} parent=5 // pred_region
        %s239 = ssub.s32 %s17, 1
        %s240 = sand.u32 %s42, 1
        %s241 = scalar_lea.sflag [#allocation4], %s240
        %s242 = sand.u32 %s42, 1
        %s243 = smul.addr %s242, 24
        %s244 = scalar_lea.vmem [#allocation3], %s243
        // Predicated region
        $region37: #{tpu_custom_call.1} parent=35 // pred_check
          %p245 = pneg %p55
        $region38: #{tpu_custom_call.1} parent=35 // pred_check_branch
          %247 = sbr.rel (%p245) target = $region40
        $region39: #{tpu_custom_call.1} parent=35 // pred_region
          %248 = dma.done %s241, 384
        $region40: #{tpu_custom_call.1} parent=35 // pred_fallthru
          _
        // Predicated region
        $region41: #{tpu_custom_call.1} parent=35 // pred_check
          %p249 = pneg %p76
        $region42: #{tpu_custom_call.1} parent=35 // pred_check_branch
          %251 = sbr.rel (%p249) target = $region44
        $region43: #{tpu_custom_call.1} parent=35 // pred_region
          %252 = dma.done [#allocation7], 512
        $region44: #{tpu_custom_call.1} parent=35 // pred_fallthru
          _
        // Predicated region
        $region45: #{tpu_custom_call.1} parent=35 // pred_check
          %p253 = pneg %p102
        $region46: #{tpu_custom_call.1} parent=35 // pred_check_branch
          %255 = sbr.rel (%p253) target = $region48
        $region47: #{tpu_custom_call.1} parent=35 // pred_region
          %256 = dma.done [#allocation7], 12288
        $region48: #{tpu_custom_call.1} parent=35 // pred_fallthru
          _
        %s257 = sand.u32 %s42, 1
        %s258 = scalar_lea.sflag [#allocation4], %s257
        %s259 = sand.u32 %s42, 1
        %s260 = smul.addr %s259, 24
        %s261 = scalar_lea.vmem [#allocation3], %s260
        %p262 = pneg %p55
        %p263 = pneg %p52
        %p264 = pneg %p76
        %p265 = pneg %p73
        %p266 = pneg %p102
        %p267 = pneg %p99
        %s268 = smul.u32 2, %s27
        %p269 = scmp.lt.s32.totalorder %s268, 1
        %s270 = scalar_select %p269, %s268, 1
        %s271 = scalar_lea.vmem %s3, %s270
        %p272 = pneg %p128
        %p273 = pneg %p125
        %p274 = pneg %p156
        %p275 = pneg %p153
        %s276 = sand.u32 %s143, 1
        %s277 = scalar_lea.sflag [#allocation5], %s276
        %s278 = sand.u32 %s143, 1
        %s279 = smul.addr %s278, 64
        %s280 = scalar_lea.vmem [#allocation9], %s279
        %s281 = smul.u32 6, %s27
        %s282 = smul.u32 2, %s27
        %p283 = scmp.lt.s32.totalorder %s282, 1
        %s284 = scalar_select %p283, %s282, 1
        %s285 = scalar_lea.vmem %s3, %s284
        %s286 = smul.u32 2, %s27
        %s287 = smul.u32 2, %s27
        %v288 = vld [vmem:[%s244] sm:$0xff]
        %v289 = vld [vmem:[%s244 + $0x8] sm:$0xff]
        %v290 = vld [vmem:[%s244 + $0x10] sm:$0xff]
        %v291 = vld [vmem:[#allocation8] sm:$0xff]
        %v292 = vld [vmem:[#allocation8 + $0x8] sm:$0xff]
        %v293 = vld [vmem:[#allocation8 + $0x10] sm:$0xff]
        %v294 = vld [vmem:[#allocation8 + $0x18] sm:$0xff]
        %v295 = vld [vmem:[#allocation8 + $0x20] sm:$0xff]
        %v296 = vld [vmem:[#allocation8 + $0x28] sm:$0xff]
        %v297 = vld [vmem:[#allocation8 + $0x30] sm:$0xff]
        %v298 = vld [vmem:[#allocation8 + $0x38] sm:$0xff]
        %v299 = vld [vmem:[#allocation8 + $0x40] sm:$0xff]
        %v300 = vld [vmem:[#allocation8 + $0x48] sm:$0xff]
        %v301 = vld [vmem:[#allocation8 + $0x50] sm:$0xff]
        %v302 = vld [vmem:[#allocation8 + $0x58] sm:$0xff]
        %v303 = vld [vmem:[#allocation8 + $0x60] sm:$0xff]
        %v304 = vld [vmem:[#allocation8 + $0x68] sm:$0xff]
        %v305 = vld [vmem:[#allocation8 + $0x70] sm:$0xff]
        %v306 = vld [vmem:[#allocation8 + $0x78] sm:$0xff]
        %v307 = vld [vmem:[#allocation8 + $0x80] sm:$0xff]
        %v308 = vld [vmem:[#allocation8 + $0x88] sm:$0xff]
        %v309 = vld [vmem:[#allocation8 + $0x90] sm:$0xff]
        %v310 = vld [vmem:[#allocation8 + $0x98] sm:$0xff]
        %v311 = vld [vmem:[#allocation8 + $0xa0] sm:$0xff]
        %v312 = vld [vmem:[#allocation8 + $0xa8] sm:$0xff]
        %v313 = vld [vmem:[#allocation8 + $0xb0] sm:$0xff]
        %v314 = vld [vmem:[#allocation8 + $0xb8] sm:$0xff]
        %v315 = vld [vmem:[#allocation8 + $0xc0] sm:$0xff]
        %v316 = vld [vmem:[#allocation8 + $0xc8] sm:$0xff]
        %v317 = vld [vmem:[#allocation8 + $0xd0] sm:$0xff]
        %v318 = vld [vmem:[#allocation8 + $0xd8] sm:$0xff]
        %v319 = vld [vmem:[#allocation8 + $0xe0] sm:$0xff]
        %v320 = vld [vmem:[#allocation8 + $0xe8] sm:$0xff]
        %v321 = vld [vmem:[#allocation8 + $0xf0] sm:$0xff]
        %v322 = vld [vmem:[#allocation8 + $0xf8] sm:$0xff]
        %v323 = vld [vmem:[#allocation8 + $0x100] sm:$0xff]
        %v324 = vld [vmem:[#allocation8 + $0x108] sm:$0xff]
        %v325 = vld [vmem:[#allocation8 + $0x110] sm:$0xff]
        %v326 = vld [vmem:[#allocation8 + $0x118] sm:$0xff]
        %v327 = vld [vmem:[#allocation8 + $0x120] sm:$0xff]
        %v328 = vld [vmem:[#allocation8 + $0x128] sm:$0xff]
        %v329 = vld [vmem:[#allocation8 + $0x130] sm:$0xff]
        %v330 = vld [vmem:[#allocation8 + $0x138] sm:$0xff]
        %v331 = vld [vmem:[#allocation8 + $0x140] sm:$0xff]
        %v332 = vld [vmem:[#allocation8 + $0x148] sm:$0xff]
        %v333 = vld [vmem:[#allocation8 + $0x150] sm:$0xff]
        %v334 = vld [vmem:[#allocation8 + $0x158] sm:$0xff]
        %v335 = vld [vmem:[#allocation8 + $0x160] sm:$0xff]
        %v336 = vld [vmem:[#allocation8 + $0x168] sm:$0xff]
        %v337 = vld [vmem:[#allocation8 + $0x170] sm:$0xff]
        %v338 = vld [vmem:[#allocation8 + $0x178] sm:$0xff]
        %v339 = vld [vmem:[#allocation8 + $0x180] sm:$0xff]
        %v340 = vld [vmem:[#allocation8 + $0x188] sm:$0xff]
        %v341 = vld [vmem:[#allocation8 + $0x190] sm:$0xff]
        %v342 = vld [vmem:[#allocation8 + $0x198] sm:$0xff]
        %v343 = vld [vmem:[#allocation8 + $0x1a0] sm:$0xff]
        %v344 = vld [vmem:[#allocation8 + $0x1a8] sm:$0xff]
        %v345 = vld [vmem:[#allocation8 + $0x1b0] sm:$0xff]
        %v346 = vld [vmem:[#allocation8 + $0x1b8] sm:$0xff]
        %v347 = vld [vmem:[#allocation8 + $0x1c0] sm:$0xff]
        %v348 = vld [vmem:[#allocation8 + $0x1c8] sm:$0xff]
        %v349 = vld [vmem:[#allocation8 + $0x1d0] sm:$0xff]
        %v350 = vld [vmem:[#allocation8 + $0x1d8] sm:$0xff]
        %v351 = vld [vmem:[#allocation8 + $0x1e0] sm:$0xff]
        %v352 = vld [vmem:[#allocation8 + $0x1e8] sm:$0xff]
        %v353 = vld [vmem:[#allocation8 + $0x1f0] sm:$0xff]
        %v354 = vld [vmem:[#allocation8 + $0x1f8] sm:$0xff]
        %v355 = vld [vmem:[#allocation8 + $0x200] sm:$0xff]
        %v356 = vld [vmem:[#allocation8 + $0x208] sm:$0xff]
        %v357 = vld [vmem:[#allocation8 + $0x210] sm:$0xff]
        %v358 = vld [vmem:[#allocation8 + $0x218] sm:$0xff]
        %v359 = vld [vmem:[#allocation8 + $0x220] sm:$0xff]
        %v360 = vld [vmem:[#allocation8 + $0x228] sm:$0xff]
        %v361 = vld [vmem:[#allocation8 + $0x230] sm:$0xff]
        %v362 = vld [vmem:[#allocation8 + $0x238] sm:$0xff]
        %v363 = vld [vmem:[#allocation8 + $0x240] sm:$0xff]
        %v364 = vld [vmem:[#allocation8 + $0x248] sm:$0xff]
        %v365 = vld [vmem:[#allocation8 + $0x250] sm:$0xff]
        %v366 = vld [vmem:[#allocation8 + $0x258] sm:$0xff]
        %v367 = vld [vmem:[#allocation8 + $0x260] sm:$0xff]
        %v368 = vld [vmem:[#allocation8 + $0x268] sm:$0xff]
        %v369 = vld [vmem:[#allocation8 + $0x270] sm:$0xff]
        %v370 = vld [vmem:[#allocation8 + $0x278] sm:$0xff]
        %v371 = vld [vmem:[#allocation8 + $0x280] sm:$0xff]
        %v372 = vld [vmem:[#allocation8 + $0x288] sm:$0xff]
        %v373 = vld [vmem:[#allocation8 + $0x290] sm:$0xff]
        %v374 = vld [vmem:[#allocation8 + $0x298] sm:$0xff]
        %v375 = vld [vmem:[#allocation8 + $0x2a0] sm:$0xff]
        %v376 = vld [vmem:[#allocation8 + $0x2a8] sm:$0xff]
        %v377 = vld [vmem:[#allocation8 + $0x2b0] sm:$0xff]
        %v378 = vld [vmem:[#allocation8 + $0x2b8] sm:$0xff]
        %v379 = vld [vmem:[#allocation8 + $0x2c0] sm:$0xff]
        %v380 = vld [vmem:[#allocation8 + $0x2c8] sm:$0xff]
        %v381 = vld [vmem:[#allocation8 + $0x2d0] sm:$0xff]
        %v382 = vld [vmem:[#allocation8 + $0x2d8] sm:$0xff]
        %v383 = vld [vmem:[#allocation8 + $0x2e0] sm:$0xff]
        %v384 = vld [vmem:[#allocation8 + $0x2e8] sm:$0xff]
        %v385 = vld [vmem:[#allocation8 + $0x2f0] sm:$0xff]
        %v386 = vld [vmem:[#allocation8 + $0x2f8] sm:$0xff]
        %387 = vmatprep.subr.mxu0 %v382
        %388 = vmatpush1.msra.mxu0 %v381
        %389 = vmatprep.subr.mxu0 %v376
        %390 = vmatpush1.msra.mxu0 %v375
        %391 = vmatprep.subr.mxu0 %v370
        %392 = vmatpush1.msra.mxu0 %v369
        %393 = vmatprep.subr.mxu0 %v364
        %394 = vmatpush1.msra.mxu0 %v363
        %395 = vmatprep.subr.mxu0 %v358
        %396 = vmatpush1.msra.mxu0 %v357
        %397 = vmatprep.subr.mxu0 %v352
        %398 = vmatpush1.msra.mxu0 %v351
        %399 = vmatprep.subr.mxu0 %v346
        %400 = vmatpush1.msra.mxu0 %v345
        %401 = vmatprep.subr.mxu0 %v340
        %402 = vmatpush1.msra.mxu0 %v339
        %403 = vmatprep.subr.mxu0 %v334
        %404 = vmatpush1.msra.mxu0 %v333
        %405 = vmatprep.subr.mxu0 %v328
        %406 = vmatpush1.msra.mxu0 %v327
        %407 = vmatprep.subr.mxu0 %v322
        %408 = vmatpush1.msra.mxu0 %v321
        %409 = vmatprep.subr.mxu0 %v316
        %410 = vmatpush1.msra.mxu0 %v315
        %411 = vmatprep.subr.mxu0 %v310
        %412 = vmatpush1.msra.mxu0 %v309
        %413 = vmatprep.subr.mxu0 %v304
        %414 = vmatpush1.msra.mxu0 %v303
        %415 = vmatprep.subr.mxu0 %v298
        %416 = vmatpush1.msra.mxu0 %v297
        %417 = vmatprep.subr.mxu0 %v292
        %418 = vmatpush1.msra.mxu0 %v291
        %419 = vmatprep.subr.mxu0 0.0
        %420 = vmatpush2.msra.mxu0 0.0
        %421 = vmatprep.subr.mxu0 0.0
        %422 = vmatpush2.msra.mxu0 0.0
        %423 = vmatprep.subr.mxu0 0.0
        %424 = vmatpush2.msra.mxu0 0.0
        %425 = vmatprep.subr.mxu0 0.0
        %426 = vmatpush2.msra.mxu0 0.0
        %427 = vmatprep.subr.mxu0 0.0
        %428 = vmatpush2.msra.mxu0 0.0
        %429 = vmatprep.subr.mxu0 0.0
        %430 = vmatpush2.msra.mxu0 0.0
        %431 = vmatprep.subr.mxu0 0.0
        %432 = vmatpush2.msra.mxu0 0.0
        %433 = vmatprep.subr.mxu0 0.0
        %434 = vmatpush2.msra.mxu0 0.0
        %435 = vmatprep.subr.mxu0 0.0
        %436 = vmatpush2.msra.mxu0 0.0
        %437 = vmatprep.subr.mxu0 0.0
        %438 = vmatpush2.msra.mxu0 0.0
        %439 = vmatprep.subr.mxu0 0.0
        %440 = vmatpush2.msra.mxu0 0.0
        %441 = vmatprep.subr.mxu0 0.0
        %442 = vmatpush2.msra.mxu0 0.0
        %443 = vmatprep.subr.mxu0 0.0
        %444 = vmatpush2.msra.mxu0 0.0
        %445 = vmatprep.subr.mxu0 0.0
        %446 = vmatpush2.msra.mxu0 0.0
        %447 = vmatprep.subr.mxu0 0.0
        %448 = vmatpush2.msra.mxu0 0.0
        %449 = vmatprep.subr.mxu0 0.0
        %450 = vmatpush2.msra.mxu0 0.0
        %451 = vmatprep.mubr.f32.mxu0 0.0
        %452 = vmatmul.mubr.f32.gmra.mxu0 %v288
        %v453 = vpop.f32.mrf.mxu0
        %v454 = vadd.f32 0.0, %v453
        %v455 = vpop.f32.mrf.mxu0
        %v456 = vadd.f32 0.0, %v455
        %457 = vmatprep.mubr.f32.mxu0 0.0
        %458 = vmatmul.mubr.f32.gmra.mxu0 %v289
        %v459 = vpop.f32.mrf.mxu0
        %v460 = vadd.f32 0.0, %v459
        %v461 = vpop.f32.mrf.mxu0
        %v462 = vadd.f32 0.0, %v461
        %463 = vmatprep.mubr.f32.mxu0 0.0
        %464 = vmatmul.mubr.f32.gmra.mxu0 %v290
        %v465 = vpop.f32.mrf.mxu0
        %v466 = vadd.f32 0.0, %v465
        %v467 = vpop.f32.mrf.mxu0
        %v468 = vadd.f32 0.0, %v467
        %469 = vdwg.mxu0
        %470 = vmatprep.subr.mxu0 %v384
        %471 = vmatpush1.msra.mxu0 %v383
        %472 = vmatprep.subr.mxu0 %v378
        %473 = vmatpush1.msra.mxu0 %v377
        %474 = vmatprep.subr.mxu0 %v372
        %475 = vmatpush1.msra.mxu0 %v371
        %476 = vmatprep.subr.mxu0 %v366
        %477 = vmatpush1.msra.mxu0 %v365
        %478 = vmatprep.subr.mxu0 %v360
        %479 = vmatpush1.msra.mxu0 %v359
        %480 = vmatprep.subr.mxu0 %v354
        %481 = vmatpush1.msra.mxu0 %v353
        %482 = vmatprep.subr.mxu0 %v348
        %483 = vmatpush1.msra.mxu0 %v347
        %484 = vmatprep.subr.mxu0 %v342
        %485 = vmatpush1.msra.mxu0 %v341
        %486 = vmatprep.subr.mxu0 %v336
        %487 = vmatpush1.msra.mxu0 %v335
        %488 = vmatprep.subr.mxu0 %v330
        %489 = vmatpush1.msra.mxu0 %v329
        %490 = vmatprep.subr.mxu0 %v324
        %491 = vmatpush1.msra.mxu0 %v323
        %492 = vmatprep.subr.mxu0 %v318
        %493 = vmatpush1.msra.mxu0 %v317
        %494 = vmatprep.subr.mxu0 %v312
        %495 = vmatpush1.msra.mxu0 %v311
        %496 = vmatprep.subr.mxu0 %v306
        %497 = vmatpush1.msra.mxu0 %v305
        %498 = vmatprep.subr.mxu0 %v300
        %499 = vmatpush1.msra.mxu0 %v299
        %500 = vmatprep.subr.mxu0 %v294
        %501 = vmatpush1.msra.mxu0 %v293
        %502 = vmatprep.subr.mxu0 0.0
        %503 = vmatpush2.msra.mxu0 0.0
        %504 = vmatprep.subr.mxu0 0.0
        %505 = vmatpush2.msra.mxu0 0.0
        %506 = vmatprep.subr.mxu0 0.0
        %507 = vmatpush2.msra.mxu0 0.0
        %508 = vmatprep.subr.mxu0 0.0
        %509 = vmatpush2.msra.mxu0 0.0
        %510 = vmatprep.subr.mxu0 0.0
        %511 = vmatpush2.msra.mxu0 0.0
        %512 = vmatprep.subr.mxu0 0.0
        %513 = vmatpush2.msra.mxu0 0.0
        %514 = vmatprep.subr.mxu0 0.0
        %515 = vmatpush2.msra.mxu0 0.0
        %516 = vmatprep.subr.mxu0 0.0
        %517 = vmatpush2.msra.mxu0 0.0
        %518 = vmatprep.subr.mxu0 0.0
        %519 = vmatpush2.msra.mxu0 0.0
        %520 = vmatprep.subr.mxu0 0.0
        %521 = vmatpush2.msra.mxu0 0.0
        %522 = vmatprep.subr.mxu0 0.0
        %523 = vmatpush2.msra.mxu0 0.0
        %524 = vmatprep.subr.mxu0 0.0
        %525 = vmatpush2.msra.mxu0 0.0
        %526 = vmatprep.subr.mxu0 0.0
        %527 = vmatpush2.msra.mxu0 0.0
        %528 = vmatprep.subr.mxu0 0.0
        %529 = vmatpush2.msra.mxu0 0.0
        %530 = vmatprep.subr.mxu0 0.0
        %531 = vmatpush2.msra.mxu0 0.0
        %532 = vmatprep.subr.mxu0 0.0
        %533 = vmatpush2.msra.mxu0 0.0
        %534 = vmatprep.mubr.f32.mxu0 0.0
        %535 = vmatmul.mubr.f32.gmra.mxu0 %v288
        %v536 = vpop.f32.mrf.mxu0
        %v537 = vadd.f32 0.0, %v536
        %v538 = vpop.f32.mrf.mxu0
        %v539 = vadd.f32 0.0, %v538
        %540 = vmatprep.mubr.f32.mxu0 0.0
        %541 = vmatmul.mubr.f32.gmra.mxu0 %v289
        %v542 = vpop.f32.mrf.mxu0
        %v543 = vadd.f32 0.0, %v542
        %v544 = vpop.f32.mrf.mxu0
        %v545 = vadd.f32 0.0, %v544
        %546 = vmatprep.mubr.f32.mxu0 0.0
        %547 = vmatmul.mubr.f32.gmra.mxu0 %v290
        %v548 = vpop.f32.mrf.mxu0
        %v549 = vadd.f32 0.0, %v548
        %v550 = vpop.f32.mrf.mxu0
        %v551 = vadd.f32 0.0, %v550
        %552 = vdwg.mxu0
        %553 = vmatprep.subr.mxu0 %v386
        %554 = vmatpush1.msra.mxu0 %v385
        %555 = vmatprep.subr.mxu0 %v380
        %556 = vmatpush1.msra.mxu0 %v379
        %557 = vmatprep.subr.mxu0 %v374
        %558 = vmatpush1.msra.mxu0 %v373
        %559 = vmatprep.subr.mxu0 %v368
        %560 = vmatpush1.msra.mxu0 %v367
        %561 = vmatprep.subr.mxu0 %v362
        %562 = vmatpush1.msra.mxu0 %v361
        %563 = vmatprep.subr.mxu0 %v356
        %564 = vmatpush1.msra.mxu0 %v355
        %565 = vmatprep.subr.mxu0 %v350
        %566 = vmatpush1.msra.mxu0 %v349
        %567 = vmatprep.subr.mxu0 %v344
        %568 = vmatpush1.msra.mxu0 %v343
        %569 = vmatprep.subr.mxu0 %v338
        %570 = vmatpush1.msra.mxu0 %v337
        %571 = vmatprep.subr.mxu0 %v332
        %572 = vmatpush1.msra.mxu0 %v331
        %573 = vmatprep.subr.mxu0 %v326
        %574 = vmatpush1.msra.mxu0 %v325
        %575 = vmatprep.subr.mxu0 %v320
        %576 = vmatpush1.msra.mxu0 %v319
        %577 = vmatprep.subr.mxu0 %v314
        %578 = vmatpush1.msra.mxu0 %v313
        %579 = vmatprep.subr.mxu0 %v308
        %580 = vmatpush1.msra.mxu0 %v307
        %581 = vmatprep.subr.mxu0 %v302
        %582 = vmatpush1.msra.mxu0 %v301
        %583 = vmatprep.subr.mxu0 %v296
        %584 = vmatpush1.msra.mxu0 %v295
        %585 = vmatprep.subr.mxu0 0.0
        %586 = vmatpush2.msra.mxu0 0.0
        %587 = vmatprep.subr.mxu0 0.0
        %588 = vmatpush2.msra.mxu0 0.0
        %589 = vmatprep.subr.mxu0 0.0
        %590 = vmatpush2.msra.mxu0 0.0
        %591 = vmatprep.subr.mxu0 0.0
        %592 = vmatpush2.msra.mxu0 0.0
        %593 = vmatprep.subr.mxu0 0.0
        %594 = vmatpush2.msra.mxu0 0.0
        %595 = vmatprep.subr.mxu0 0.0
        %596 = vmatpush2.msra.mxu0 0.0
        %597 = vmatprep.subr.mxu0 0.0
        %598 = vmatpush2.msra.mxu0 0.0
        %599 = vmatprep.subr.mxu0 0.0
        %600 = vmatpush2.msra.mxu0 0.0
        %601 = vmatprep.subr.mxu0 0.0
        %602 = vmatpush2.msra.mxu0 0.0
        %603 = vmatprep.subr.mxu0 0.0
        %604 = vmatpush2.msra.mxu0 0.0
        %605 = vmatprep.subr.mxu0 0.0
        %606 = vmatpush2.msra.mxu0 0.0
        %607 = vmatprep.subr.mxu0 0.0
        %608 = vmatpush2.msra.mxu0 0.0
        %609 = vmatprep.subr.mxu0 0.0
        %610 = vmatpush2.msra.mxu0 0.0
        %611 = vmatprep.subr.mxu0 0.0
        %612 = vmatpush2.msra.mxu0 0.0
        %613 = vmatprep.subr.mxu0 0.0
        %614 = vmatpush2.msra.mxu0 0.0
        %615 = vmatprep.subr.mxu0 0.0
        %616 = vmatpush2.msra.mxu0 0.0
        %617 = vmatprep.mubr.f32.mxu0 0.0
        %618 = vmatmul.mubr.f32.gmra.mxu0 %v288
        %v619 = vpop.f32.mrf.mxu0
        %v620 = vadd.f32 0.0, %v619
        %v621 = vpop.f32.mrf.mxu0
        %v622 = vadd.f32 0.0, %v621
        %623 = vmatprep.mubr.f32.mxu0 0.0
        %624 = vmatmul.mubr.f32.gmra.mxu0 %v289
        %v625 = vpop.f32.mrf.mxu0
        %v626 = vadd.f32 0.0, %v625
        %v627 = vpop.f32.mrf.mxu0
        %v628 = vadd.f32 0.0, %v627
        %629 = vmatprep.mubr.f32.mxu0 0.0
        %630 = vmatmul.mubr.f32.gmra.mxu0 %v290
        %v631 = vpop.f32.mrf.mxu0
        %v632 = vadd.f32 0.0, %v631
        %v633 = vpop.f32.mrf.mxu0
        %v634 = vadd.f32 0.0, %v633
        %635 = vdwg.mxu0
        %636 = vst [vmem:[#allocation2] sm:$0xff] %v454
        %637 = vst [vmem:[#allocation2 + $0x8] sm:$0xff] %v456
        %638 = vst [vmem:[#allocation2 + $0x10] sm:$0xff] %v460
        %639 = vst [vmem:[#allocation2 + $0x18] sm:$0xff] %v462
        %640 = vst [vmem:[#allocation2 + $0x20] sm:$0xff] %v466
        %641 = vst [vmem:[#allocation2 + $0x28] sm:$0xff] %v468
        %642 = vst [vmem:[#allocation2 + $0x30] sm:$0xff] %v537
        %643 = vst [vmem:[#allocation2 + $0x38] sm:$0xff] %v539
        %644 = vst [vmem:[#allocation2 + $0x40] sm:$0xff] %v543
        %645 = vst [vmem:[#allocation2 + $0x48] sm:$0xff] %v545
        %646 = vst [vmem:[#allocation2 + $0x50] sm:$0xff] %v549
        %647 = vst [vmem:[#allocation2 + $0x58] sm:$0xff] %v551
        %648 = vst [vmem:[#allocation2 + $0x60] sm:$0xff] %v620
        %649 = vst [vmem:[#allocation2 + $0x68] sm:$0xff] %v622
        %650 = vst [vmem:[#allocation2 + $0x70] sm:$0xff] %v626
        %651 = vst [vmem:[#allocation2 + $0x78] sm:$0xff] %v628
        %652 = vst [vmem:[#allocation2 + $0x80] sm:$0xff] %v632
        %653 = vst [vmem:[#allocation2 + $0x88] sm:$0xff] %v634
        %v654 = vld [vmem:[#allocation6] sm:$0xff]
        %v655 = vld [vmem:[#allocation6 + $0x8] sm:$0xff]
        %v656 = vld [vmem:[#allocation6 + $0x10] sm:$0xff]
        %v657 = vld [vmem:[#allocation6 + $0x18] sm:$0xff]
        %v658 = vld [vmem:[#allocation2] sm:$0xff]
        %v659 = vld [vmem:[#allocation2 + $0x8] sm:$0xff]
        %v660 = vld [vmem:[#allocation2 + $0x10] sm:$0xff]
        %v661 = vld [vmem:[#allocation2 + $0x18] sm:$0xff]
        %v662 = vld [vmem:[#allocation2 + $0x20] sm:$0xff]
        %v663 = vld [vmem:[#allocation2 + $0x28] sm:$0xff]
        %v664 = vld [vmem:[#allocation2 + $0x30] sm:$0xff]
        %v665 = vld [vmem:[#allocation2 + $0x38] sm:$0xff]
        %v666 = vld [vmem:[#allocation2 + $0x40] sm:$0xff]
        %v667 = vld [vmem:[#allocation2 + $0x48] sm:$0xff]
        %v668 = vld [vmem:[#allocation2 + $0x50] sm:$0xff]
        %v669 = vld [vmem:[#allocation2 + $0x58] sm:$0xff]
        %v670 = vld [vmem:[#allocation2 + $0x60] sm:$0xff]
        %v671 = vld [vmem:[#allocation2 + $0x68] sm:$0xff]
        %v672 = vld [vmem:[#allocation2 + $0x70] sm:$0xff]
        %v673 = vld [vmem:[#allocation2 + $0x78] sm:$0xff]
        %v674 = vld [vmem:[#allocation2 + $0x80] sm:$0xff]
        %v675 = vld [vmem:[#allocation2 + $0x88] sm:$0xff]
        %v676 = vld [vmem:[%s285] sm:$0x3]
        %v678 = vlaneseq
        %v679 = vshrl.u32 %v678, 7
        %v680 = vsub.s32 0, %v679
        %v681 = vrot.slane %v676, %v680
        %v682 = vlaneseq
        %v683 = vshrl.u32 %v682, 7
        %v684 = vsub.s32 1, %v683
        %v685 = vrot.slane %v676, %v684
        %vm688 = vcmask 588800
        %v690 = vsel %vm688, %v654, 0
        %v693 = vsel %vm688, %v655, 0
        %v696 = vsel %vm688, %v656, 0
        %v699 = vsel %vm688, %v657, 0
        %701 = vmatprep.subr.mxu0 0.0
        %702 = vmatpush1.msra.mxu0 0.0
        %703 = vmatprep.subr.mxu0 0.0
        %704 = vmatpush1.msra.mxu0 0.0
        %705 = vmatprep.subr.mxu0 0.0
        %706 = vmatpush1.msra.mxu0 0.0
        %707 = vmatprep.subr.mxu0 0.0
        %708 = vmatpush1.msra.mxu0 0.0
        %709 = vmatprep.subr.mxu0 0.0
        %710 = vmatpush1.msra.mxu0 0.0
        %711 = vmatprep.subr.mxu0 0.0
        %712 = vmatpush1.msra.mxu0 0.0
        %713 = vmatprep.subr.mxu0 0.0
        %714 = vmatpush1.msra.mxu0 0.0
        %715 = vmatprep.subr.mxu0 %v675
        %716 = vmatpush1.msra.mxu0 %v674
        %717 = vmatprep.subr.mxu0 %v673
        %718 = vmatpush1.msra.mxu0 %v672
        %719 = vmatprep.subr.mxu0 %v671
        %720 = vmatpush1.msra.mxu0 %v670
        %721 = vmatprep.subr.mxu0 %v669
        %722 = vmatpush1.msra.mxu0 %v668
        %723 = vmatprep.subr.mxu0 %v667
        %724 = vmatpush1.msra.mxu0 %v666
        %725 = vmatprep.subr.mxu0 %v665
        %726 = vmatpush1.msra.mxu0 %v664
        %727 = vmatprep.subr.mxu0 %v663
        %728 = vmatpush1.msra.mxu0 %v662
        %729 = vmatprep.subr.mxu0 %v661
        %730 = vmatpush1.msra.mxu0 %v660
        %731 = vmatprep.subr.mxu0 %v659
        %732 = vmatpush1.msra.mxu0 %v658
        %733 = vmatprep.subr.mxu0 0.0
        %734 = vmatpush2.msra.mxu0 0.0
        %735 = vmatprep.subr.mxu0 0.0
        %736 = vmatpush2.msra.mxu0 0.0
        %737 = vmatprep.subr.mxu0 0.0
        %738 = vmatpush2.msra.mxu0 0.0
        %739 = vmatprep.subr.mxu0 0.0
        %740 = vmatpush2.msra.mxu0 0.0
        %741 = vmatprep.subr.mxu0 0.0
        %742 = vmatpush2.msra.mxu0 0.0
        %743 = vmatprep.subr.mxu0 0.0
        %744 = vmatpush2.msra.mxu0 0.0
        %745 = vmatprep.subr.mxu0 0.0
        %746 = vmatpush2.msra.mxu0 0.0
        %747 = vmatprep.subr.mxu0 0.0
        %748 = vmatpush2.msra.mxu0 0.0
        %749 = vmatprep.subr.mxu0 0.0
        %750 = vmatpush2.msra.mxu0 0.0
        %751 = vmatprep.subr.mxu0 0.0
        %752 = vmatpush2.msra.mxu0 0.0
        %753 = vmatprep.subr.mxu0 0.0
        %754 = vmatpush2.msra.mxu0 0.0
        %755 = vmatprep.subr.mxu0 0.0
        %756 = vmatpush2.msra.mxu0 0.0
        %757 = vmatprep.subr.mxu0 0.0
        %758 = vmatpush2.msra.mxu0 0.0
        %759 = vmatprep.subr.mxu0 0.0
        %760 = vmatpush2.msra.mxu0 0.0
        %761 = vmatprep.subr.mxu0 0.0
        %762 = vmatpush2.msra.mxu0 0.0
        %763 = vmatprep.subr.mxu0 0.0
        %764 = vmatpush2.msra.mxu0 0.0
        %765 = vmatprep.mubr.f32.mxu0 0.0
        %766 = vmatmul.mubr.f32.gmra.mxu0 %v690
        %v767 = vpop.f32.mrf.mxu0
        %v768 = vadd.f32 %v681, %v767
        %v769 = vpop.f32.mrf.mxu0
        %v770 = vadd.f32 %v685, %v769
        %771 = vmatprep.mubr.f32.mxu0 0.0
        %772 = vmatmul.mubr.f32.gmra.mxu0 %v693
        %v773 = vpop.f32.mrf.mxu0
        %v774 = vadd.f32 %v681, %v773
        %v775 = vpop.f32.mrf.mxu0
        %v776 = vadd.f32 %v685, %v775
        %777 = vmatprep.mubr.f32.mxu0 0.0
        %778 = vmatmul.mubr.f32.gmra.mxu0 %v696
        %v779 = vpop.f32.mrf.mxu0
        %v780 = vadd.f32 %v681, %v779
        %v781 = vpop.f32.mrf.mxu0
        %v782 = vadd.f32 %v685, %v781
        %783 = vmatprep.mubr.f32.mxu0 0.0
        %784 = vmatmul.mubr.f32.gmra.mxu0 %v699
        %v785 = vpop.f32.mrf.mxu0
        %v786 = vadd.f32 %v681, %v785
        %v787 = vpop.f32.mrf.mxu0
        %v788 = vadd.f32 %v685, %v787
        %789 = vdwg.mxu0
        %790 = vst [vmem:[%s280] sm:$0xff] %v768
        %791 = vst [vmem:[%s280 + $0x8] sm:$0xff] %v770
        %792 = vst [vmem:[%s280 + $0x10] sm:$0xff] %v774
        %793 = vst [vmem:[%s280 + $0x18] sm:$0xff] %v776
        %794 = vst [vmem:[%s280 + $0x20] sm:$0xff] %v780
        %795 = vst [vmem:[%s280 + $0x28] sm:$0xff] %v782
        %796 = vst [vmem:[%s280 + $0x30] sm:$0xff] %v786
        %797 = vst [vmem:[%s280 + $0x38] sm:$0xff] %v788
        %s798 = sand.u32 %s143, 1
        %s799 = scalar_lea.sflag [#allocation5], %s798
        %s800 = sand.u32 %s143, 1
        %s801 = smul.addr %s800, 64
        %s802 = scalar_lea.vmem [#allocation9], %s801
        // Predicated region
        $region49: #{tpu_custom_call.1} parent=35 // pred_check
          %p803 = pneg %p153
        $region50: #{tpu_custom_call.1} parent=35 // pred_check_branch
          %805 = sbr.rel (%p803) target = $region52
        $region51: #{tpu_custom_call.1} parent=35 // pred_region
          %s806 = smul.u32 2, %s27
          %s808 = ssub.s32 1024, 1024
          %809 = vsyncadd %s799, %s808
          %s810 = smul.addr %s26, 8
          %s811 = sadd.s32 %s806, %s810
          %s812 = smul.addr %s811, 128
          %s813 = scalar_lea.hbm %s4, %s812
          %s814 = sshll.u32 %s802, 4
          %s815 = int_to_ptr.vmem [resolvable:$true] %s814
          %820 = dma.vmem_to_hbm [thread:$0]  %s815, 1024, %s813, %s799, 256, 256, 16
        $region52: #{tpu_custom_call.1} parent=35 // pred_fallthru
          _
      $region36: #{tpu_custom_call.1} parent=5 // pred_fallthru
        _
      %p821 = scmp.le.s32.totalorder 2, %s17
      // Predicated region
      $region53: #{tpu_custom_call.1} parent=5 // pred_check
        %p822 = pneg %p821
      $region54: #{tpu_custom_call.1} parent=5 // pred_check_branch
        %824 = sbr.rel (%p822) target = $region56
      $region55: #{tpu_custom_call.1} parent=5 // pred_region
        %s825 = ssub.s32 %s17, 2
        // Predicated region
        $region57: #{tpu_custom_call.1} parent=55 // pred_check
          %p826 = pneg %p159
        $region58: #{tpu_custom_call.1} parent=55 // pred_check_branch
          %828 = sbr.rel (%p826) target = $region60
        $region59: #{tpu_custom_call.1} parent=55 // pred_region
          %s829 = sand.u32 %s144, 1
          %s830 = scalar_lea.sflag [#allocation5], %s829
          %s831 = sand.u32 %s144, 1
          %s832 = smul.addr %s831, 64
          %s833 = scalar_lea.vmem [#allocation9], %s832
          %834 = dma.done %s830, 1024
        $region60: #{tpu_custom_call.1} parent=55 // pred_fallthru
          _
      $region56: #{tpu_custom_call.1} parent=5 // pred_fallthru
        _
    $region6: #{tpu_custom_call.1} parent=1 // loop_footer
      %s21 = sadd.s32 1, %s17
    $region7: #{tpu_custom_call.1} parent=1 // loop_footer_branch
      %16 = sbr.rel target = $region3
    $region8: #{tpu_custom_call.1} parent=1 // loop_exit
      _
    %835 = vsyncpa [#allocation4], 1
    %s836 = scalar_lea.sflag [#allocation4], 1
    %837 = vsyncpa %s836, 1
    %838 = vsyncpa [#allocation7], 1
    %839 = vsyncpa [#allocation5], 1
    %s840 = scalar_lea.sflag [#allocation5], 1
    %841 = vsyncpa %s840, 1

</llo_original>
